<compile_context>
chip_gen: v6e
topology: v6e:2x2x1
jax: 0.10.0
libtpu: 0.0.40
codegen_flags: <defaults>
</compile_context>

<pallas_src>
import jax
import jax.numpy as jnp
from jax.experimental import pallas as pl
from jax.experimental.pallas import tpu as pltpu


def _round_up(a, m):
    return (a + m - 1) // m * m


def encoder2_kernel(x_ref, w1_ref, b1_ref, w2_ref, b2_ref, o_ref):
    # lin1: weight-norm linear (bf16 MXU operands, f32 accumulation) + ReLU.
    x_bf = x_ref[...].astype(jnp.bfloat16)                       # (TM, D)
    h = jnp.dot(x_bf, w1_ref[...], preferred_element_type=jnp.float32)
    h = jnp.maximum(h + b1_ref[...], 0.0)                        # f32, (TM, H)
    # lin2: Dropout(0.2) is identity at inference; weight-norm linear, no activation.
    acc = jnp.dot(h.astype(jnp.bfloat16), w2_ref[...],
                  preferred_element_type=jnp.float32)            # (TM, Sp)
    o_ref[...] = (acc + b2_ref[...]).astype(o_ref.dtype)


def _build_call(M, D, H, Sp, TM, grid, out_dtype, single_buffer_weights):
    if single_buffer_weights and hasattr(pl, "Buffered"):
        wkw = dict(pipeline_mode=pl.Buffered(1))   # weights never change across steps
    else:
        wkw = {}

    grid_spec = pltpu.PrefetchScalarGridSpec(
        num_scalar_prefetch=0,
        grid=grid,
        in_specs=[
            pl.BlockSpec((TM, D), lambda i: (i, 0)),            # x tile (full D)
            pl.BlockSpec((D, H), lambda i: (0, 0), **wkw),      # W1 (resident)
            pl.BlockSpec((1, H), lambda i: (0, 0), **wkw),      # b1
            pl.BlockSpec((H, Sp), lambda i: (0, 0), **wkw),     # W2 (resident)
            pl.BlockSpec((1, Sp), lambda i: (0, 0), **wkw),     # b2
        ],
        out_specs=pl.BlockSpec((TM, Sp), lambda i: (i, 0)),
    )
    return pl.pallas_call(
        encoder2_kernel,
        out_shape=jax.ShapeDtypeStruct((M, Sp), out_dtype),
        grid_spec=grid_spec,
        compiler_params=pltpu.CompilerParams(
            dimension_semantics=("parallel",),
            vmem_limit_bytes=32 * 1024 * 1024,
        ),
    )


def encoder2_forward(x, params):
    """x: (..., input_size) -> (..., state_size), matching Encoder_2.forward (eval)."""
    w1, b1 = params["w1"], params["b1"]     # (D, H), (1, H)
    w2, b2 = params["w2"], params["b2"]     # (H, S), (1, S)

    D, H = w1.shape
    S = w2.shape[1]
    lead = x.shape[:-1]

    # Metadata-only reshape: no pad / cast pass over the activations.
    x2 = x.reshape(-1, D)
    M = x2.shape[0]

    # Lane-dense output: pad only the (small) weight/bias feature dim to 128.
    Sp = _round_up(S, 128)
    w1_p = w1.astype(jnp.bfloat16)
    b1_p = b1.astype(jnp.float32)
    w2_p = jnp.pad(w2, ((0, 0), (0, Sp - S))).astype(jnp.bfloat16)
    b2_p = jnp.pad(b2, ((0, 0), (0, Sp - S))).astype(jnp.float32)

    # Row-tile size: large enough to amortize per-step overhead, but keep >= 2
    # parallel grid steps so both v7x TensorCores get work.
    if M >= 512:
        TM = 512
    elif M >= 256:
        TM = 256
    elif M >= 128:
        TM = 128
    else:
        TM = _round_up(max(M, 1), 8)
    while pl.cdiv(M, TM) < 2 and TM > 8:
        TM = _round_up(TM // 2, 8)
    grid = (pl.cdiv(M, TM),)   # ragged last block handled by Pallas (masked store)

    args = (x2, w1_p, b1_p, w2_p, b2_p)
    try:
        out_p = _build_call(M, D, H, Sp, TM, grid, jnp.float32, True)(*args)
    except Exception:
        # Fallback: identical kernel without single-buffered weight specs.
        out_p = _build_call(M, D, H, Sp, TM, grid, jnp.float32, False)(*args)

    return out_p[:, :S].reshape(*lead, S)


def encoder2_reference(x, p):
    """Plain-JAX f32 reference mirroring the PyTorch forward (eval mode)."""
    h = jax.nn.relu(
        jnp.dot(x, p["w1"], precision=jax.lax.Precision.HIGHEST) + p["b1"])
    return jnp.dot(h, p["w2"], precision=jax.lax.Precision.HIGHEST) + p["b2"]


if __name__ == "__main__":
    # Small shapes consistent with the module: Encoder_2(input_size, state_size, num_layers)
    B, N = 2, 8                   # batch, tokens per example
    input_size, state_size = 32, 32
    hidden = 512                  # fixed by the module (lin1 out / lin2 in)
    # num_layers is irrelevant: Encoder_2.forward never touches self.layers.

    key = jax.random.PRNGKey(0)
    k1, k2, k3, k4, k5 = jax.random.split(key, 5)

    params = {
        "w1": jax.random.normal(k1, (input_size, hidden), jnp.float32) * 0.05,
        "b1": jax.random.normal(k2, (1, hidden), jnp.float32) * 0.05,
        "w2": jax.random.normal(k3, (hidden, state_size), jnp.float32) * 0.05,
        "b2": jax.random.normal(k4, (1, state_size), jnp.float32) * 0.05,
    }

    x = jax.random.normal(k5, (B, N, input_size), jnp.float32)

    out = encoder2_forward(x, params)
    jax.block_until_ready(out)

    ref = encoder2_reference(x, params)
    assert out.shape == (B, N, state_size), out.shape
    # bf16 MXU operands with f32 accumulation: tolerance loosened accordingly.
    assert jnp.allclose(out, ref, atol=2e-2, rtol=2e-2), \
        float(jnp.max(jnp.abs(out - ref)))

    print("KERNEL_OK")
</pallas_src>

<mosaic_0001>
module attributes {stable_mosaic.version = 11 : i64} {
  func.func @encoder2_kernel(%arg0: i32, %arg1: memref<8x32xf32, #tpu.memory_space<vmem>>, %arg2: memref<32x512xbf16, #tpu.memory_space<vmem>>, %arg3: memref<1x512xf32, #tpu.memory_space<vmem>>, %arg4: memref<512x128xbf16, #tpu.memory_space<vmem>>, %arg5: memref<1x128xf32, #tpu.memory_space<vmem>>, %arg6: memref<8x128xf32, #tpu.memory_space<vmem>>) attributes {dimension_semantics = [#tpu.dimension_semantics<parallel>], iteration_bounds = array<i64: 2>, scalar_prefetch = 0 : i64, scratch_operands = 0 : i64, tpu.core_type = #tpu.core_type<tc>, window_params = [{transform_indices = @transform_0, window_bounds = array<i64: 8, 32>}, {pipeline_mode = #tpu.pipeline_mode<synchronous>, transform_indices = @transform_1, window_bounds = array<i64: 32, 512>}, {pipeline_mode = #tpu.pipeline_mode<synchronous>, transform_indices = @transform_2, window_bounds = array<i64: 1, 512>}, {pipeline_mode = #tpu.pipeline_mode<synchronous>, transform_indices = @transform_3, window_bounds = array<i64: 512, 128>}, {pipeline_mode = #tpu.pipeline_mode<synchronous>, transform_indices = @transform_4, window_bounds = array<i64: 1, 128>}, {transform_indices = @transform_5, window_bounds = array<i64: 8, 128>}]} {
    %c0 = arith.constant 0 : index
    %c0_0 = arith.constant 0 : index
    %0 = vector.load %arg1[%c0, %c0_0] : memref<8x32xf32, #tpu.memory_space<vmem>>, vector<8x32xf32>
    %1 = arith.truncf %0 : vector<8x32xf32> to vector<8x32xbf16>
    %c0_1 = arith.constant 0 : index
    %c0_2 = arith.constant 0 : index
    %2 = vector.load %arg2[%c0_1, %c0_2] : memref<32x512xbf16, #tpu.memory_space<vmem>>, vector<32x512xbf16>
    %cst = arith.constant dense<0.000000e+00> : vector<8x512xf32>
    %3 = tpu.matmul %1, %2, %cst {dimension_numbers = #tpu.dot_dimension_numbers<[1], [0], [0], [1], [0, 0, 1, 1], [], []>} : vector<8x32xbf16>, vector<32x512xbf16>, vector<8x512xf32> -> vector<8x512xf32>
    %c0_3 = arith.constant 0 : index
    %c0_4 = arith.constant 0 : index
    %4 = vector.load %arg3[%c0_3, %c0_4] : memref<1x512xf32, #tpu.memory_space<vmem>>, vector<1x512xf32>
    %5 = vector.broadcast %4 : vector<1x512xf32> to vector<8x512xf32>
    %6 = arith.addf %3, %5 : vector<8x512xf32>
    %cst_5 = arith.constant 0.000000e+00 : f32
    %7 = vector.broadcast %cst_5 : f32 to vector<8x512xf32>
    %8 = arith.maximumf %6, %7 : vector<8x512xf32>
    %9 = arith.truncf %8 : vector<8x512xf32> to vector<8x512xbf16>
    %c0_6 = arith.constant 0 : index
    %c0_7 = arith.constant 0 : index
    %10 = vector.load %arg4[%c0_6, %c0_7] : memref<512x128xbf16, #tpu.memory_space<vmem>>, vector<512x128xbf16>
    %cst_8 = arith.constant dense<0.000000e+00> : vector<8x128xf32>
    %11 = tpu.matmul %9, %10, %cst_8 {dimension_numbers = #tpu.dot_dimension_numbers<[1], [0], [0], [1], [0, 0, 1, 1], [], []>} : vector<8x512xbf16>, vector<512x128xbf16>, vector<8x128xf32> -> vector<8x128xf32>
    %c0_9 = arith.constant 0 : index
    %c0_10 = arith.constant 0 : index
    %12 = vector.load %arg5[%c0_9, %c0_10] : memref<1x128xf32, #tpu.memory_space<vmem>>, vector<1x128xf32>
    %13 = vector.broadcast %12 : vector<1x128xf32> to vector<8x128xf32>
    %14 = arith.addf %11, %13 : vector<8x128xf32>
    %c0_11 = arith.constant 0 : index
    %c0_12 = arith.constant 0 : index
    %15 = vector.load %arg6[%c0_11, %c0_12] : memref<8x128xf32, #tpu.memory_space<vmem>>, vector<8x128xf32>
    tpu.vector_store %arg6[%c0_11, %c0_12], %14 {strides = array<i32>} : memref<8x128xf32, #tpu.memory_space<vmem>>, vector<8x128xf32>,
    return
  }
  func.func @transform_0(%arg0: i32) -> (i32, i32) {
    %c0_i32 = arith.constant 0 : i32
    %c0_i32_0 = arith.constant 0 : i32
    return %arg0, %c0_i32 : i32, i32
  }
  func.func @transform_1(%arg0: i32) -> (i32, i32) {
    %c0_i32 = arith.constant 0 : i32
    %c0_i32_0 = arith.constant 0 : i32
    %c0_i32_1 = arith.constant 0 : i32
    return %c0_i32, %c0_i32_0 : i32, i32
  }
  func.func @transform_2(%arg0: i32) -> (i32, i32) {
    %c0_i32 = arith.constant 0 : i32
    %c0_i32_0 = arith.constant 0 : i32
    %c0_i32_1 = arith.constant 0 : i32
    return %c0_i32, %c0_i32_0 : i32, i32
  }
  func.func @transform_3(%arg0: i32) -> (i32, i32) {
    %c0_i32 = arith.constant 0 : i32
    %c0_i32_0 = arith.constant 0 : i32
    %c0_i32_1 = arith.constant 0 : i32
    return %c0_i32, %c0_i32_0 : i32, i32
  }
  func.func @transform_4(%arg0: i32) -> (i32, i32) {
    %c0_i32 = arith.constant 0 : i32
    %c0_i32_0 = arith.constant 0 : i32
    %c0_i32_1 = arith.constant 0 : i32
    return %c0_i32, %c0_i32_0 : i32, i32
  }
  func.func @transform_5(%arg0: i32) -> (i32, i32) {
    %c0_i32 = arith.constant 0 : i32
    %c0_i32_0 = arith.constant 0 : i32
    return %arg0, %c0_i32 : i32, i32
  }
}

module attributes {stable_mosaic.version = 11 : i64} {
  func.func @encoder2_kernel(%arg0: i32, %arg1: memref<8x32xf32, #tpu.memory_space<vmem>>, %arg2: memref<32x512xbf16, #tpu.memory_space<vmem>>, %arg3: memref<1x512xf32, #tpu.memory_space<vmem>>, %arg4: memref<512x128xbf16, #tpu.memory_space<vmem>>, %arg5: memref<1x128xf32, #tpu.memory_space<vmem>>, %arg6: memref<8x128xf32, #tpu.memory_space<vmem>>) attributes {dimension_semantics = [#tpu.dimension_semantics<parallel>], iteration_bounds = array<i64: 2>, scalar_prefetch = 0 : i64, scratch_operands = 0 : i64, tpu.core_type = #tpu.core_type<tc>, window_params = [{transform_indices = @transform_0, window_bounds = array<i64: 8, 32>}, {pipeline_mode = #tpu.pipeline_mode<synchronous>, transform_indices = @transform_1, window_bounds = array<i64: 32, 512>}, {pipeline_mode = #tpu.pipeline_mode<synchronous>, transform_indices = @transform_2, window_bounds = array<i64: 1, 512>}, {pipeline_mode = #tpu.pipeline_mode<synchronous>, transform_indices = @transform_3, window_bounds = array<i64: 512, 128>}, {pipeline_mode = #tpu.pipeline_mode<synchronous>, transform_indices = @transform_4, window_bounds = array<i64: 1, 128>}, {transform_indices = @transform_5, window_bounds = array<i64: 8, 128>}]} {
    %c0 = arith.constant 0 : index
    %c0_0 = arith.constant 0 : index
    %0 = vector.load %arg1[%c0, %c0_0] : memref<8x32xf32, #tpu.memory_space<vmem>>, vector<8x32xf32>
    %1 = arith.truncf %0 : vector<8x32xf32> to vector<8x32xbf16>
    %c0_1 = arith.constant 0 : index
    %c0_2 = arith.constant 0 : index
    %2 = vector.load %arg2[%c0_1, %c0_2] : memref<32x512xbf16, #tpu.memory_space<vmem>>, vector<32x512xbf16>
    %cst = arith.constant dense<0.000000e+00> : vector<8x512xf32>
    %3 = tpu.matmul %1, %2, %cst {dimension_numbers = #tpu.dot_dimension_numbers<[1], [0], [0], [1], [0, 0, 1, 1], [], []>} : vector<8x32xbf16>, vector<32x512xbf16>, vector<8x512xf32> -> vector<8x512xf32>
    %c0_3 = arith.constant 0 : index
    %c0_4 = arith.constant 0 : index
    %4 = vector.load %arg3[%c0_3, %c0_4] : memref<1x512xf32, #tpu.memory_space<vmem>>, vector<1x512xf32>
    %5 = vector.broadcast %4 : vector<1x512xf32> to vector<8x512xf32>
    %6 = arith.addf %3, %5 : vector<8x512xf32>
    %cst_5 = arith.constant 0.000000e+00 : f32
    %7 = vector.broadcast %cst_5 : f32 to vector<8x512xf32>
    %8 = arith.maximumf %6, %7 : vector<8x512xf32>
    %9 = arith.truncf %8 : vector<8x512xf32> to vector<8x512xbf16>
    %c0_6 = arith.constant 0 : index
    %c0_7 = arith.constant 0 : index
    %10 = vector.load %arg4[%c0_6, %c0_7] : memref<512x128xbf16, #tpu.memory_space<vmem>>, vector<512x128xbf16>
    %cst_8 = arith.constant dense<0.000000e+00> : vector<8x128xf32>
    %11 = tpu.matmul %9, %10, %cst_8 {dimension_numbers = #tpu.dot_dimension_numbers<[1], [0], [0], [1], [0, 0, 1, 1], [], []>} : vector<8x512xbf16>, vector<512x128xbf16>, vector<8x128xf32> -> vector<8x128xf32>
    %c0_9 = arith.constant 0 : index
    %c0_10 = arith.constant 0 : index
    %12 = vector.load %arg5[%c0_9, %c0_10] : memref<1x128xf32, #tpu.memory_space<vmem>>, vector<1x128xf32>
    %13 = vector.broadcast %12 : vector<1x128xf32> to vector<8x128xf32>
    %14 = arith.addf %11, %13 : vector<8x128xf32>
    %c0_11 = arith.constant 0 : index
    %c0_12 = arith.constant 0 : index
    %15 = vector.load %arg6[%c0_11, %c0_12] : memref<8x128xf32, #tpu.memory_space<vmem>>, vector<8x128xf32>
    tpu.vector_store %arg6[%c0_11, %c0_12], %14 {strides = array<i32>} : memref<8x128xf32, #tpu.memory_space<vmem>>, vector<8x128xf32>,
    return
  }
  func.func @transform_0(%arg0: i32) -> (i32, i32) {
    %c0_i32 = arith.constant 0 : i32
    %c0_i32_0 = arith.constant 0 : i32
    return %arg0, %c0_i32 : i32, i32
  }
  func.func @transform_1(%arg0: i32) -> (i32, i32) {
    %c0_i32 = arith.constant 0 : i32
    %c0_i32_0 = arith.constant 0 : i32
    %c0_i32_1 = arith.constant 0 : i32
    return %c0_i32, %c0_i32_0 : i32, i32
  }
  func.func @transform_2(%arg0: i32) -> (i32, i32) {
    %c0_i32 = arith.constant 0 : i32
    %c0_i32_0 = arith.constant 0 : i32
    %c0_i32_1 = arith.constant 0 : i32
    return %c0_i32, %c0_i32_0 : i32, i32
  }
  func.func @transform_3(%arg0: i32) -> (i32, i32) {
    %c0_i32 = arith.constant 0 : i32
    %c0_i32_0 = arith.constant 0 : i32
    %c0_i32_1 = arith.constant 0 : i32
    return %c0_i32, %c0_i32_0 : i32, i32
  }
  func.func @transform_4(%arg0: i32) -> (i32, i32) {
    %c0_i32 = arith.constant 0 : i32
    %c0_i32_0 = arith.constant 0 : i32
    %c0_i32_1 = arith.constant 0 : i32
    return %c0_i32, %c0_i32_0 : i32, i32
  }
  func.func @transform_5(%arg0: i32) -> (i32, i32) {
    %c0_i32 = arith.constant 0 : i32
    %c0_i32_0 = arith.constant 0 : i32
    return %arg0, %c0_i32 : i32, i32
  }
}

</mosaic_0001>

<llo_original>
// kernel: tpu_custom_call.1
$region0: #{tpu_custom_call.1}
  #allocation0 [shape = 'u32[]', space=smem, size = 0x4, offset = 0x4, fixed_abs, tag = 'smem constant byte address 0x4 - core index']
  #allocation1 [shape = 'u32[144,128]{1,0:T(1,128)}', space=vmem, size = 0x12000, scoped, tag = 'internal scratch']
  %s0 = inlined_call_operand.hbm [shape: f32[16,32], index: 0, kind: input, shape index: {}]
  %s1 = inlined_call_operand.hbm [shape: bf16[32,512], index: 1, kind: input, shape index: {}]
  %s2 = inlined_call_operand.hbm [shape: f32[1,512], index: 2, kind: input, shape index: {}]
  %s3 = inlined_call_operand.hbm [shape: bf16[512,128], index: 3, kind: input, shape index: {}]
  %s4 = inlined_call_operand.vmem [shape: f32[1,128], index: 4, kind: input, shape index: {}]
  %s5 = inlined_call_operand.hbm [shape: f32[16,128], index: 5, kind: output, shape index: {}]
  %s6 = sld [smem:[#allocation0]]
  $region69: #{tpu_custom_call.1} parent=0
    _
  %s8 = ssub.s32 1, %s6
  %s9 = scalar_select 0, %s8, %s6
  $region1: #{tpu_custom_call.1} parent=0
    #allocation2 [shape = 'u8[8192]{0}', space=vmem, size = 0x2000, scoped, tag = 'input window, operand 0']
    #allocation3 [shape = 's32[2]{0}', space=sflag, size = 0x8, scoped, tag = 'scoped memory for tpu_custom_call.1']
    #allocation4 [shape = 's32[2]{0}', space=sflag, size = 0x8, scoped, tag = 'scoped memory for tpu_custom_call.1']
    #allocation5 [shape = 'u8[32768]{0}', space=vmem, size = 0x8000, scoped, tag = 'input window, operand 1, single buffered']
    #allocation6 [shape = 's32[1]{0}', space=sflag, size = 0x4, scoped, tag = 'scoped memory for tpu_custom_call.1']
    #allocation7 [shape = 'u8[2048]{0}', space=vmem, size = 0x800, scoped, tag = 'input window, operand 2, single buffered']
    #allocation8 [shape = 'u8[131072]{0}', space=vmem, size = 0x20000, scoped, tag = 'input window, operand 3, single buffered']
    #allocation9 [shape = 's32[1]{0}', space=sflag, size = 0x4, scoped, tag = 'scoped memory for tpu_custom_call.1']
    #allocation10 [shape = 'u8[8192]{0}', space=vmem, size = 0x2000, scoped, tag = 'output window, operand 0']
    %10 = vsyncpa [#allocation3], 0
    %s11 = scalar_lea.sflag [#allocation3], 1
    %12 = vsyncpa %s11, 0
    %13 = vsyncpa [#allocation6], 0
    %14 = vsyncpa [#allocation9], 0
    %15 = vsyncpa [#allocation4], 0
    %s16 = scalar_lea.sflag [#allocation4], 1
    %17 = vsyncpa %s16, 0
    loop: start=0, step=1, limit=4
    $region2: #{tpu_custom_call.1} parent=1 // loop_pre_header
      _
    $region3: #{tpu_custom_call.1} parent=1 // loop_header
      %s19 = sphi 0, %s23
      %p20 = scmp.ge.s32.totalorder %s19, 4
      %s29 = sphi 0, %s31
      %s32 = sphi 0, %s29
      %s33 = sphi 0, %s32
      %s49 = sphi 0, %s33
      %s53 = sphi 0, %s53
      %s55 = sphi 0, %s53
      %s56 = sphi 0, %s55
      %s70 = sphi 0, %s56
      %s74 = sphi 0, %s74
      %s76 = sphi 0, %s74
      %s77 = sphi 0, %s76
      %s91 = sphi 0, %s77
      %s95 = sphi 0, %s95
      %s97 = sphi 0, %s95
      %s98 = sphi 0, %s97
      %s112 = sphi 0, %s98
      %s116 = sphi 0, %s116
      %s118 = sphi 0, %s116
      %s119 = sphi 0, %s118
      %s133 = sphi 0, %s119
      %s139 = sphi 0, %s141
      %s142 = sphi 0, %s139
      %s143 = sphi 0, %s142
      %s159 = sphi 0, %s143
    $region4: #{tpu_custom_call.1} parent=1 // loop_header_branch
      %22 = sbr.rel (%p20) target = $region8
    $region5: #{tpu_custom_call.1} parent=1 // loop_body
      %s24 = ssub.s32 %s19, 1
      %s25 = ssub.s32 %s19, 2
      %s26 = sadd.s32 %s19, 1
      %s27 = ssub.s32 %s19, %s26
      %p28 = scmp.eq.s32.totalorder %s27, 0
      %s30 = sadd.s32 %s29, 1
      %s31 = scalar_select %p28, %s29, %s30
      %p34 = pneg %p28
      %p35 = scmp.eq.s32.totalorder %s19, 1
      %p36 = por %p34, %p35
      %p37 = scmp.ne.s32.totalorder %s29, %s32
      %p38 = scmp.eq.s32.totalorder %s19, 0
      %p39 = por %p37, %p38
      %p40 = scmp.ne.s32.totalorder %s29, %s32
      %p41 = scmp.eq.s32.totalorder %s24, 1
      %p42 = por %p40, %p41
      %p43 = scmp.ne.s32.totalorder %s32, %s33
      %p44 = scmp.eq.s32.totalorder %s24, 0
      %p45 = por %p43, %p44
      %p46 = scmp.ne.s32.totalorder %s32, %s33
      %p47 = scmp.eq.s32.totalorder %s25, 1
      %p48 = por %p46, %p47
      %p50 = scmp.ne.s32.totalorder %s33, %s49
      %p51 = scmp.eq.s32.totalorder %s25, 0
      %p52 = por %p50, %p51
      %s54 = sadd.s32 %s53, 1
      %p57 = scmp.eq.s32.totalorder %s19, 1
      %p58 = scmp.ne.s32.totalorder %s53, %s55
      %p59 = scmp.eq.s32.totalorder %s19, 0
      %p60 = por %p58, %p59
      %p61 = scmp.ne.s32.totalorder %s53, %s55
      %p62 = scmp.eq.s32.totalorder %s24, 1
      %p63 = por %p61, %p62
      %p64 = scmp.ne.s32.totalorder %s55, %s56
      %p65 = scmp.eq.s32.totalorder %s24, 0
      %p66 = por %p64, %p65
      %p67 = scmp.ne.s32.totalorder %s55, %s56
      %p68 = scmp.eq.s32.totalorder %s25, 1
      %p69 = por %p67, %p68
      %p71 = scmp.ne.s32.totalorder %s56, %s70
      %p72 = scmp.eq.s32.totalorder %s25, 0
      %p73 = por %p71, %p72
      %s75 = sadd.s32 %s74, 1
      %p78 = scmp.eq.s32.totalorder %s19, 1
      %p79 = scmp.ne.s32.totalorder %s74, %s76
      %p80 = scmp.eq.s32.totalorder %s19, 0
      %p81 = por %p79, %p80
      %p82 = scmp.ne.s32.totalorder %s74, %s76
      %p83 = scmp.eq.s32.totalorder %s24, 1
      %p84 = por %p82, %p83
      %p85 = scmp.ne.s32.totalorder %s76, %s77
      %p86 = scmp.eq.s32.totalorder %s24, 0
      %p87 = por %p85, %p86
      %p88 = scmp.ne.s32.totalorder %s76, %s77
      %p89 = scmp.eq.s32.totalorder %s25, 1
      %p90 = por %p88, %p89
      %p92 = scmp.ne.s32.totalorder %s77, %s91
      %p93 = scmp.eq.s32.totalorder %s25, 0
      %p94 = por %p92, %p93
      %s96 = sadd.s32 %s95, 1
      %p99 = scmp.eq.s32.totalorder %s19, 1
      %p100 = scmp.ne.s32.totalorder %s95, %s97
      %p101 = scmp.eq.s32.totalorder %s19, 0
      %p102 = por %p100, %p101
      %p103 = scmp.ne.s32.totalorder %s95, %s97
      %p104 = scmp.eq.s32.totalorder %s24, 1
      %p105 = por %p103, %p104
      %p106 = scmp.ne.s32.totalorder %s97, %s98
      %p107 = scmp.eq.s32.totalorder %s24, 0
      %p108 = por %p106, %p107
      %p109 = scmp.ne.s32.totalorder %s97, %s98
      %p110 = scmp.eq.s32.totalorder %s25, 1
      %p111 = por %p109, %p110
      %p113 = scmp.ne.s32.totalorder %s98, %s112
      %p114 = scmp.eq.s32.totalorder %s25, 0
      %p115 = por %p113, %p114
      %s117 = sadd.s32 %s116, 1
      %p120 = scmp.eq.s32.totalorder %s19, 1
      %p121 = scmp.ne.s32.totalorder %s116, %s118
      %p122 = scmp.eq.s32.totalorder %s19, 0
      %p123 = por %p121, %p122
      %p124 = scmp.ne.s32.totalorder %s116, %s118
      %p125 = scmp.eq.s32.totalorder %s24, 1
      %p126 = por %p124, %p125
      %p127 = scmp.ne.s32.totalorder %s118, %s119
      %p128 = scmp.eq.s32.totalorder %s24, 0
      %p129 = por %p127, %p128
      %p130 = scmp.ne.s32.totalorder %s118, %s119
      %p131 = scmp.eq.s32.totalorder %s25, 1
      %p132 = por %p130, %p131
      %p134 = scmp.ne.s32.totalorder %s119, %s133
      %p135 = scmp.eq.s32.totalorder %s25, 0
      %p136 = por %p134, %p135
      %s137 = ssub.s32 %s19, %s26
      %p138 = scmp.eq.s32.totalorder %s137, 0
      %s140 = sadd.s32 %s139, 1
      %s141 = scalar_select %p138, %s139, %s140
      %p144 = pneg %p138
      %p145 = scmp.eq.s32.totalorder %s19, 1
      %p146 = por %p144, %p145
      %p147 = scmp.ne.s32.totalorder %s139, %s142
      %p148 = scmp.eq.s32.totalorder %s19, 0
      %p149 = por %p147, %p148
      %p150 = scmp.ne.s32.totalorder %s139, %s142
      %p151 = scmp.eq.s32.totalorder %s24, 1
      %p152 = por %p150, %p151
      %p153 = scmp.ne.s32.totalorder %s142, %s143
      %p154 = scmp.eq.s32.totalorder %s24, 0
      %p155 = por %p153, %p154
      %p156 = scmp.ne.s32.totalorder %s142, %s143
      %p157 = scmp.eq.s32.totalorder %s25, 1
      %p158 = por %p156, %p157
      %p160 = scmp.ne.s32.totalorder %s143, %s159
      %p161 = scmp.eq.s32.totalorder %s25, 0
      %p162 = por %p160, %p161
      %p163 = scmp.le.s32.totalorder 1, %s19
      %p164 = scmp.lt.s32.totalorder %s19, 3
      %p165 = pnand %p163, %p164
      %p166 = pneg %p165
      // Predicated region
      $region9: #{tpu_custom_call.1} parent=5 // pred_check
        _
      $region10: #{tpu_custom_call.1} parent=5 // pred_check_branch
        %168 = sbr.rel (%p165) target = $region12
      $region11: #{tpu_custom_call.1} parent=5 // pred_region
        %s169 = ssub.s32 %s19, 1
        // Predicated region
        $region13: #{tpu_custom_call.1} parent=11 // pred_check
          %p170 = pneg %p66
        $region14: #{tpu_custom_call.1} parent=11 // pred_check_branch
          %172 = sbr.rel (%p170) target = $region16
        $region15: #{tpu_custom_call.1} parent=11 // pred_region
          %s174 = ssub.s32 1024, 1024
          %175 = vsyncadd [#allocation6], %s174
          %s176 = sshll.u32 [#allocation5], 4
          %s177 = int_to_ptr.vmem [resolvable:$true] %s176
          %182 = dma.hbm_to_vmem [thread:$0]  %s1, 1024, %s177, [#allocation6], 256, 256, 16
        $region16: #{tpu_custom_call.1} parent=11 // pred_fallthru
          _
        // Predicated region
        $region17: #{tpu_custom_call.1} parent=11 // pred_check
          %p183 = pneg %p87
        $region18: #{tpu_custom_call.1} parent=11 // pred_check_branch
          %185 = sbr.rel (%p183) target = $region20
        $region19: #{tpu_custom_call.1} parent=11 // pred_region
          %s187 = ssub.s32 64, 64
          %188 = vsyncadd [#allocation6], %s187
          %s190 = sshll.u32 [#allocation7], 4
          %s191 = int_to_ptr.vmem [resolvable:$true] %s190
          %193 = dma.hbm_to_vmem [thread:$0]  %s2, 64, %s191, [#allocation6]
        $region20: #{tpu_custom_call.1} parent=11 // pred_fallthru
          _
        // Predicated region
        $region21: #{tpu_custom_call.1} parent=11 // pred_check
          %p194 = pneg %p108
        $region22: #{tpu_custom_call.1} parent=11 // pred_check_branch
          %196 = sbr.rel (%p194) target = $region24
        $region23: #{tpu_custom_call.1} parent=11 // pred_region
          %s198 = ssub.s32 4096, 4096
          %199 = vsyncadd [#allocation9], %s198
          %s200 = sshll.u32 [#allocation8], 4
          %s201 = int_to_ptr.vmem [resolvable:$true] %s200
          %206 = dma.hbm_to_vmem [thread:$0]  %s3, 4096, %s201, [#allocation9], 64, 64, 4
        $region24: #{tpu_custom_call.1} parent=11 // pred_fallthru
          _
        // Predicated region
        $region25: #{tpu_custom_call.1} parent=11 // pred_check
          %p207 = pneg %p129
        $region26: #{tpu_custom_call.1} parent=11 // pred_check_branch
          %209 = sbr.rel (%p207) target = $region28
        $region27: #{tpu_custom_call.1} parent=11 // pred_region
          _
        $region28: #{tpu_custom_call.1} parent=11 // pred_fallthru
          _
      $region12: #{tpu_custom_call.1} parent=5 // pred_fallthru
        _
      %p210 = scmp.lt.s32.totalorder %s19, 2
      // Predicated region
      $region29: #{tpu_custom_call.1} parent=5 // pred_check
        %p211 = pneg %p210
      $region30: #{tpu_custom_call.1} parent=5 // pred_check_branch
        %213 = sbr.rel (%p211) target = $region32
      $region31: #{tpu_custom_call.1} parent=5 // pred_region
        // Predicated region
        $region33: #{tpu_custom_call.1} parent=31 // pred_check
          %p214 = pneg %p39
        $region34: #{tpu_custom_call.1} parent=31 // pred_check_branch
          %216 = sbr.rel (%p214) target = $region36
        $region35: #{tpu_custom_call.1} parent=31 // pred_region
          %s217 = sand.u32 %s29, 1
          %s218 = scalar_lea.sflag [#allocation3], %s217
          %s219 = sand.u32 %s29, 1
          %s220 = smul.addr %s219, 8
          %s221 = scalar_lea.vmem [#allocation2], %s220
          %s223 = ssub.s32 128, 128
          %224 = vsyncadd %s218, %s223
          %s225 = smul.addr %s19, 128
          %s226 = scalar_lea.hbm %s0, %s225
          %s228 = sshll.u32 %s221, 4
          %s229 = int_to_ptr.vmem [resolvable:$true] %s228
          %231 = dma.hbm_to_vmem [thread:$0]  %s226, 128, %s229, %s218
        $region36: #{tpu_custom_call.1} parent=31 // pred_fallthru
          _
      $region32: #{tpu_custom_call.1} parent=5 // pred_fallthru
        _
      %p232 = scmp.le.s32.totalorder 1, %s19
      %p233 = scmp.lt.s32.totalorder %s19, 3
      %p234 = pnand %p232, %p233
      %p235 = pneg %p234
      // Predicated region
      $region37: #{tpu_custom_call.1} parent=5 // pred_check
        _
      $region38: #{tpu_custom_call.1} parent=5 // pred_check_branch
        %237 = sbr.rel (%p234) target = $region40
      $region39: #{tpu_custom_call.1} parent=5 // pred_region
        %s238 = ssub.s32 %s19, 1
        %s239 = sand.u32 %s32, 1
        %s240 = scalar_lea.sflag [#allocation3], %s239
        %s241 = sand.u32 %s32, 1
        %s242 = smul.addr %s241, 8
        %s243 = scalar_lea.vmem [#allocation2], %s242
        // Predicated region
        $region41: #{tpu_custom_call.1} parent=39 // pred_check
          %p244 = pneg %p45
        $region42: #{tpu_custom_call.1} parent=39 // pred_check_branch
          %246 = sbr.rel (%p244) target = $region44
        $region43: #{tpu_custom_call.1} parent=39 // pred_region
          %247 = dma.done %s240, 128
        $region44: #{tpu_custom_call.1} parent=39 // pred_fallthru
          _
        // Predicated region
        $region45: #{tpu_custom_call.1} parent=39 // pred_check
          %p248 = pneg %p66
        $region46: #{tpu_custom_call.1} parent=39 // pred_check_branch
          %250 = sbr.rel (%p248) target = $region48
        $region47: #{tpu_custom_call.1} parent=39 // pred_region
          %251 = dma.done [#allocation6], 1024
        $region48: #{tpu_custom_call.1} parent=39 // pred_fallthru
          _
        // Predicated region
        $region49: #{tpu_custom_call.1} parent=39 // pred_check
          %p252 = pneg %p87
        $region50: #{tpu_custom_call.1} parent=39 // pred_check_branch
          %254 = sbr.rel (%p252) target = $region52
        $region51: #{tpu_custom_call.1} parent=39 // pred_region
          %255 = dma.done [#allocation6], 64
        $region52: #{tpu_custom_call.1} parent=39 // pred_fallthru
          _
        // Predicated region
        $region53: #{tpu_custom_call.1} parent=39 // pred_check
          %p256 = pneg %p108
        $region54: #{tpu_custom_call.1} parent=39 // pred_check_branch
          %258 = sbr.rel (%p256) target = $region56
        $region55: #{tpu_custom_call.1} parent=39 // pred_region
          %259 = dma.done [#allocation9], 4096
        $region56: #{tpu_custom_call.1} parent=39 // pred_fallthru
          _
        %s260 = sand.u32 %s32, 1
        %s261 = scalar_lea.sflag [#allocation3], %s260
        %s262 = sand.u32 %s32, 1
        %s263 = smul.addr %s262, 8
        %s264 = scalar_lea.vmem [#allocation2], %s263
        %p265 = pneg %p45
        %p266 = pneg %p42
        %p267 = pneg %p66
        %p268 = pneg %p63
        %p269 = pneg %p87
        %p270 = pneg %p84
        %p271 = pneg %p108
        %p272 = pneg %p105
        %p273 = pneg %p129
        %p274 = pneg %p126
        %p275 = pneg %p155
        %p276 = pneg %p152
        %s277 = sand.u32 %s142, 1
        %s278 = scalar_lea.sflag [#allocation4], %s277
        %s279 = sand.u32 %s142, 1
        %s280 = smul.addr %s279, 8
        %s281 = scalar_lea.vmem [#allocation10], %s280
        %v283 = vld [vmem:[%s243] sm:$0xff]
        %v284 = vpack.c.bf16 %v283, %v283
        %v285 = vld [vmem:[#allocation5] sm:$0xff]
        %v286 = vld [vmem:[#allocation5 + $0x8] sm:$0xff]
        %v287 = vld [vmem:[#allocation5 + $0x10] sm:$0xff]
        %v288 = vld [vmem:[#allocation5 + $0x18] sm:$0xff]
        %v289 = vld [vmem:[#allocation5 + $0x20] sm:$0xff]
        %v290 = vld [vmem:[#allocation5 + $0x28] sm:$0xff]
        %v291 = vld [vmem:[#allocation5 + $0x30] sm:$0xff]
        %v292 = vld [vmem:[#allocation5 + $0x38] sm:$0xff]
        %v293 = vld [vmem:[#allocation7] sm:$0xf]
        %v295 = vlaneseq
        %v296 = vshrl.u32 %v295, 7
        %v297 = vsub.s32 0, %v296
        %v298 = vrot.slane %v293, %v297
        %v299 = vlaneseq
        %v300 = vshrl.u32 %v299, 7
        %v301 = vsub.s32 1, %v300
        %v302 = vrot.slane %v293, %v301
        %v303 = vlaneseq
        %v304 = vshrl.u32 %v303, 7
        %v305 = vsub.s32 2, %v304
        %v306 = vrot.slane %v293, %v305
        %v307 = vlaneseq
        %v308 = vshrl.u32 %v307, 7
        %v309 = vsub.s32 3, %v308
        %v310 = vrot.slane %v293, %v309
        %v323 = vunpack.c.l.b16 %v285
        %v324 = vunpack.c.h.b16 %v285
        %v325 = vunpack.c.l.b16 %v286
        %v326 = vunpack.c.h.b16 %v286
        %v327 = vunpack.c.l.b16 %v287
        %v328 = vunpack.c.h.b16 %v287
        %v329 = vunpack.c.l.b16 %v288
        %v330 = vunpack.c.h.b16 %v288
        %v331 = vunpack.c.l.b16 %v289
        %v332 = vunpack.c.h.b16 %v289
        %v333 = vunpack.c.l.b16 %v290
        %v334 = vunpack.c.h.b16 %v290
        %v335 = vunpack.c.l.b16 %v291
        %v336 = vunpack.c.h.b16 %v291
        %v337 = vunpack.c.l.b16 %v292
        %v338 = vunpack.c.h.b16 %v292
        %v339 = vpack.c.b16 %v327, %v323
        %v340 = vpack.c.b16 %v328, %v324
        %v341 = vpack.c.b16 %v329, %v325
        %v342 = vpack.c.b16 %v330, %v326
        %v343 = vpack.c.b16 %v335, %v331
        %v344 = vpack.c.b16 %v336, %v332
        %v345 = vpack.c.b16 %v337, %v333
        %v346 = vpack.c.b16 %v338, %v334
        %vm355 = vcmask 261120
        %v357 = vsel %vm355, %v284, 0
        %359 = vmatprep.subr.bf16.mxu0 0
        %360 = vmatpush1.bf16.msra.mxu0 0
        %361 = vmatprep.subr.bf16.mxu0 0
        %362 = vmatpush1.bf16.msra.mxu0 0
        %363 = vmatprep.subr.bf16.mxu0 0
        %364 = vmatpush1.bf16.msra.mxu0 0
        %365 = vmatprep.subr.bf16.mxu0 0
        %366 = vmatpush1.bf16.msra.mxu0 0
        %367 = vmatprep.subr.bf16.mxu0 0
        %368 = vmatpush1.bf16.msra.mxu0 0
        %369 = vmatprep.subr.bf16.mxu0 0
        %370 = vmatpush1.bf16.msra.mxu0 0
        %371 = vmatprep.subr.bf16.mxu0 %v344
        %372 = vmatpush1.bf16.msra.mxu0 %v343
        %373 = vmatprep.subr.bf16.mxu0 %v340
        %374 = vmatpush1.bf16.msra.mxu0 %v339
        %375 = vmatprep.subr.bf16.mxu0 0
        %376 = vmatpush2.bf16.msra.mxu0 0
        %377 = vmatprep.subr.bf16.mxu0 0
        %378 = vmatpush2.bf16.msra.mxu0 0
        %379 = vmatprep.subr.bf16.mxu0 0
        %380 = vmatpush2.bf16.msra.mxu0 0
        %381 = vmatprep.subr.bf16.mxu0 0
        %382 = vmatpush2.bf16.msra.mxu0 0
        %383 = vmatprep.subr.bf16.mxu0 0
        %384 = vmatpush2.bf16.msra.mxu0 0
        %385 = vmatprep.subr.bf16.mxu0 0
        %386 = vmatpush2.bf16.msra.mxu0 0
        %387 = vmatprep.subr.bf16.mxu0 0
        %388 = vmatpush2.bf16.msra.mxu0 0
        %389 = vmatprep.subr.bf16.mxu0 0
        %390 = vmatpush2.bf16.msra.mxu0 0
        %391 = vmatprep.mubr.bf16.mxu0 0
        %392 = vmatmul.mubr.bf16.gmra.mxu0 %v357
        %v393 = vpop.f32.mrf.mxu0
        %v394 = vadd.f32 %v298, %v393
        %v395 = vpop.f32.mrf.mxu0
        %v396 = vadd.f32 %v302, %v395
        %v397 = vpop.f32.mrf.mxu0
        %v398 = vpop.f32.mrf.mxu0
        %399 = vdwg.mxu0
        %400 = vmatprep.subr.bf16.mxu0 0
        %401 = vmatpush1.bf16.msra.mxu0 0
        %402 = vmatprep.subr.bf16.mxu0 0
        %403 = vmatpush1.bf16.msra.mxu0 0
        %404 = vmatprep.subr.bf16.mxu0 0
        %405 = vmatpush1.bf16.msra.mxu0 0
        %406 = vmatprep.subr.bf16.mxu0 0
        %407 = vmatpush1.bf16.msra.mxu0 0
        %408 = vmatprep.subr.bf16.mxu0 0
        %409 = vmatpush1.bf16.msra.mxu0 0
        %410 = vmatprep.subr.bf16.mxu0 0
        %411 = vmatpush1.bf16.msra.mxu0 0
        %412 = vmatprep.subr.bf16.mxu0 %v346
        %413 = vmatpush1.bf16.msra.mxu0 %v345
        %414 = vmatprep.subr.bf16.mxu0 %v342
        %415 = vmatpush1.bf16.msra.mxu0 %v341
        %416 = vmatprep.subr.bf16.mxu0 0
        %417 = vmatpush2.bf16.msra.mxu0 0
        %418 = vmatprep.subr.bf16.mxu0 0
        %419 = vmatpush2.bf16.msra.mxu0 0
        %420 = vmatprep.subr.bf16.mxu0 0
        %421 = vmatpush2.bf16.msra.mxu0 0
        %422 = vmatprep.subr.bf16.mxu0 0
        %423 = vmatpush2.bf16.msra.mxu0 0
        %424 = vmatprep.subr.bf16.mxu0 0
        %425 = vmatpush2.bf16.msra.mxu0 0
        %426 = vmatprep.subr.bf16.mxu0 0
        %427 = vmatpush2.bf16.msra.mxu0 0
        %428 = vmatprep.subr.bf16.mxu0 0
        %429 = vmatpush2.bf16.msra.mxu0 0
        %430 = vmatprep.subr.bf16.mxu0 0
        %431 = vmatpush2.bf16.msra.mxu0 0
        %432 = vmatprep.mubr.bf16.mxu0 0
        %433 = vmatmul.mubr.bf16.gmra.mxu0 %v357
        %v434 = vpop.f32.mrf.mxu0
        %v435 = vadd.f32 %v306, %v434
        %v436 = vpop.f32.mrf.mxu0
        %v437 = vadd.f32 %v310, %v436
        %v438 = vpop.f32.mrf.mxu0
        %v439 = vpop.f32.mrf.mxu0
        %440 = vdwg.mxu0
        %v441 = vmax.f32 %v394, 0.0
        %v442 = vmax.f32 %v396, 0.0
        %v443 = vmax.f32 %v435, 0.0
        %v444 = vmax.f32 %v437, 0.0
        %v445 = vpack.c.bf16 %v441, %v441
        %v446 = vpack.c.bf16 %v442, %v442
        %v447 = vpack.c.bf16 %v443, %v443
        %v448 = vpack.c.bf16 %v444, %v444
        %v449 = vld [vmem:[#allocation8] sm:$0xf]
        %v450 = vld [vmem:[#allocation8 + $0x4] sm:$0xf]
        %v451 = vld [vmem:[#allocation8 + $0x8] sm:$0xf]
        %v452 = vld [vmem:[#allocation8 + $0xc] sm:$0xf]
        %v453 = vld [vmem:[#allocation8 + $0x10] sm:$0xf]
        %v454 = vld [vmem:[#allocation8 + $0x14] sm:$0xf]
        %v455 = vld [vmem:[#allocation8 + $0x18] sm:$0xf]
        %v456 = vld [vmem:[#allocation8 + $0x1c] sm:$0xf]
        %v457 = vld [vmem:[#allocation8 + $0x20] sm:$0xf]
        %v458 = vld [vmem:[#allocation8 + $0x24] sm:$0xf]
        %v459 = vld [vmem:[#allocation8 + $0x28] sm:$0xf]
        %v460 = vld [vmem:[#allocation8 + $0x2c] sm:$0xf]
        %v461 = vld [vmem:[#allocation8 + $0x30] sm:$0xf]
        %v462 = vld [vmem:[#allocation8 + $0x34] sm:$0xf]
        %v463 = vld [vmem:[#allocation8 + $0x38] sm:$0xf]
        %v464 = vld [vmem:[#allocation8 + $0x3c] sm:$0xf]
        %v465 = vld [vmem:[#allocation8 + $0x40] sm:$0xf]
        %v466 = vld [vmem:[#allocation8 + $0x44] sm:$0xf]
        %v467 = vld [vmem:[#allocation8 + $0x48] sm:$0xf]
        %v468 = vld [vmem:[#allocation8 + $0x4c] sm:$0xf]
        %v469 = vld [vmem:[#allocation8 + $0x50] sm:$0xf]
        %v470 = vld [vmem:[#allocation8 + $0x54] sm:$0xf]
        %v471 = vld [vmem:[#allocation8 + $0x58] sm:$0xf]
        %v472 = vld [vmem:[#allocation8 + $0x5c] sm:$0xf]
        %v473 = vld [vmem:[#allocation8 + $0x60] sm:$0xf]
        %v474 = vld [vmem:[#allocation8 + $0x64] sm:$0xf]
        %v475 = vld [vmem:[#allocation8 + $0x68] sm:$0xf]
        %v476 = vld [vmem:[#allocation8 + $0x6c] sm:$0xf]
        %v477 = vld [vmem:[#allocation8 + $0x70] sm:$0xf]
        %v478 = vld [vmem:[#allocation8 + $0x74] sm:$0xf]
        %v479 = vld [vmem:[#allocation8 + $0x78] sm:$0xf]
        %v480 = vld [vmem:[#allocation8 + $0x7c] sm:$0xf]
        %v481 = vld [vmem:[#allocation8 + $0x80] sm:$0xf]
        %v482 = vld [vmem:[#allocation8 + $0x84] sm:$0xf]
        %v483 = vld [vmem:[#allocation8 + $0x88] sm:$0xf]
        %v484 = vld [vmem:[#allocation8 + $0x8c] sm:$0xf]
        %v485 = vld [vmem:[#allocation8 + $0x90] sm:$0xf]
        %v486 = vld [vmem:[#allocation8 + $0x94] sm:$0xf]
        %v487 = vld [vmem:[#allocation8 + $0x98] sm:$0xf]
        %v488 = vld [vmem:[#allocation8 + $0x9c] sm:$0xf]
        %v489 = vld [vmem:[#allocation8 + $0xa0] sm:$0xf]
        %v490 = vld [vmem:[#allocation8 + $0xa4] sm:$0xf]
        %v491 = vld [vmem:[#allocation8 + $0xa8] sm:$0xf]
        %v492 = vld [vmem:[#allocation8 + $0xac] sm:$0xf]
        %v493 = vld [vmem:[#allocation8 + $0xb0] sm:$0xf]
        %v494 = vld [vmem:[#allocation8 + $0xb4] sm:$0xf]
        %v495 = vld [vmem:[#allocation8 + $0xb8] sm:$0xf]
        %v496 = vld [vmem:[#allocation8 + $0xbc] sm:$0xf]
        %v497 = vld [vmem:[#allocation8 + $0xc0] sm:$0xf]
        %v498 = vld [vmem:[#allocation8 + $0xc4] sm:$0xf]
        %v499 = vld [vmem:[#allocation8 + $0xc8] sm:$0xf]
        %v500 = vld [vmem:[#allocation8 + $0xcc] sm:$0xf]
        %v501 = vld [vmem:[#allocation8 + $0xd0] sm:$0xf]
        %v502 = vld [vmem:[#allocation8 + $0xd4] sm:$0xf]
        %v503 = vld [vmem:[#allocation8 + $0xd8] sm:$0xf]
        %v504 = vld [vmem:[#allocation8 + $0xdc] sm:$0xf]
        %v505 = vld [vmem:[#allocation8 + $0xe0] sm:$0xf]
        %v506 = vld [vmem:[#allocation8 + $0xe4] sm:$0xf]
        %v507 = vld [vmem:[#allocation8 + $0xe8] sm:$0xf]
        %v508 = vld [vmem:[#allocation8 + $0xec] sm:$0xf]
        %v509 = vld [vmem:[#allocation8 + $0xf0] sm:$0xf]
        %v510 = vld [vmem:[#allocation8 + $0xf4] sm:$0xf]
        %v511 = vld [vmem:[#allocation8 + $0xf8] sm:$0xf]
        %v512 = vld [vmem:[#allocation8 + $0xfc] sm:$0xf]
        %v513 = vld [vmem:[%s4] sm:$0x1]
        %v515 = vlaneseq
        %v516 = vshrl.u32 %v515, 7
        %v517 = vsub.s32 0, %v516
        %v518 = vrot.slane %v513, %v517
        %v584 = vunpack.c.l.b16 %v449
        %v585 = vunpack.c.l.b16 %v450
        %v586 = vunpack.c.l.b16 %v451
        %v587 = vunpack.c.l.b16 %v452
        %v588 = vunpack.c.l.b16 %v453
        %v589 = vunpack.c.l.b16 %v454
        %v590 = vunpack.c.l.b16 %v455
        %v591 = vunpack.c.l.b16 %v456
        %v592 = vunpack.c.l.b16 %v457
        %v593 = vunpack.c.l.b16 %v458
        %v594 = vunpack.c.l.b16 %v459
        %v595 = vunpack.c.l.b16 %v460
        %v596 = vunpack.c.l.b16 %v461
        %v597 = vunpack.c.l.b16 %v462
        %v598 = vunpack.c.l.b16 %v463
        %v599 = vunpack.c.l.b16 %v464
        %v600 = vunpack.c.l.b16 %v465
        %v601 = vunpack.c.l.b16 %v466
        %v602 = vunpack.c.l.b16 %v467
        %v603 = vunpack.c.l.b16 %v468
        %v604 = vunpack.c.l.b16 %v469
        %v605 = vunpack.c.l.b16 %v470
        %v606 = vunpack.c.l.b16 %v471
        %v607 = vunpack.c.l.b16 %v472
        %v608 = vunpack.c.l.b16 %v473
        %v609 = vunpack.c.l.b16 %v474
        %v610 = vunpack.c.l.b16 %v475
        %v611 = vunpack.c.l.b16 %v476
        %v612 = vunpack.c.l.b16 %v477
        %v613 = vunpack.c.l.b16 %v478
        %v614 = vunpack.c.l.b16 %v479
        %v615 = vunpack.c.l.b16 %v480
        %v616 = vunpack.c.l.b16 %v481
        %v617 = vunpack.c.l.b16 %v482
        %v618 = vunpack.c.l.b16 %v483
        %v619 = vunpack.c.l.b16 %v484
        %v620 = vunpack.c.l.b16 %v485
        %v621 = vunpack.c.l.b16 %v486
        %v622 = vunpack.c.l.b16 %v487
        %v623 = vunpack.c.l.b16 %v488
        %v624 = vunpack.c.l.b16 %v489
        %v625 = vunpack.c.l.b16 %v490
        %v626 = vunpack.c.l.b16 %v491
        %v627 = vunpack.c.l.b16 %v492
        %v628 = vunpack.c.l.b16 %v493
        %v629 = vunpack.c.l.b16 %v494
        %v630 = vunpack.c.l.b16 %v495
        %v631 = vunpack.c.l.b16 %v496
        %v632 = vunpack.c.l.b16 %v497
        %v633 = vunpack.c.l.b16 %v498
        %v634 = vunpack.c.l.b16 %v499
        %v635 = vunpack.c.l.b16 %v500
        %v636 = vunpack.c.l.b16 %v501
        %v637 = vunpack.c.l.b16 %v502
        %v638 = vunpack.c.l.b16 %v503
        %v639 = vunpack.c.l.b16 %v504
        %v640 = vunpack.c.l.b16 %v505
        %v641 = vunpack.c.l.b16 %v506
        %v642 = vunpack.c.l.b16 %v507
        %v643 = vunpack.c.l.b16 %v508
        %v644 = vunpack.c.l.b16 %v509
        %v645 = vunpack.c.l.b16 %v510
        %v646 = vunpack.c.l.b16 %v511
        %v647 = vunpack.c.l.b16 %v512
        %v648 = vpack.c.b16 %v585, %v584
        %v649 = vpack.c.b16 %v587, %v586
        %v650 = vpack.c.b16 %v589, %v588
        %v651 = vpack.c.b16 %v591, %v590
        %v652 = vpack.c.b16 %v593, %v592
        %v653 = vpack.c.b16 %v595, %v594
        %v654 = vpack.c.b16 %v597, %v596
        %v655 = vpack.c.b16 %v599, %v598
        %v656 = vpack.c.b16 %v601, %v600
        %v657 = vpack.c.b16 %v603, %v602
        %v658 = vpack.c.b16 %v605, %v604
        %v659 = vpack.c.b16 %v607, %v606
        %v660 = vpack.c.b16 %v609, %v608
        %v661 = vpack.c.b16 %v611, %v610
        %v662 = vpack.c.b16 %v613, %v612
        %v663 = vpack.c.b16 %v615, %v614
        %v664 = vpack.c.b16 %v617, %v616
        %v665 = vpack.c.b16 %v619, %v618
        %v666 = vpack.c.b16 %v621, %v620
        %v667 = vpack.c.b16 %v623, %v622
        %v668 = vpack.c.b16 %v625, %v624
        %v669 = vpack.c.b16 %v627, %v626
        %v670 = vpack.c.b16 %v629, %v628
        %v671 = vpack.c.b16 %v631, %v630
        %v672 = vpack.c.b16 %v633, %v632
        %v673 = vpack.c.b16 %v635, %v634
        %v674 = vpack.c.b16 %v637, %v636
        %v675 = vpack.c.b16 %v639, %v638
        %v676 = vpack.c.b16 %v641, %v640
        %v677 = vpack.c.b16 %v643, %v642
        %v678 = vpack.c.b16 %v645, %v644
        %v679 = vpack.c.b16 %v647, %v646
        %712 = vmatprep.subr.bf16.mxu0 0
        %713 = vmatpush1.bf16.msra.mxu0 %v655
        %714 = vmatprep.subr.bf16.mxu0 0
        %715 = vmatpush1.bf16.msra.mxu0 %v654
        %716 = vmatprep.subr.bf16.mxu0 0
        %717 = vmatpush1.bf16.msra.mxu0 %v653
        %718 = vmatprep.subr.bf16.mxu0 0
        %719 = vmatpush1.bf16.msra.mxu0 %v652
        %720 = vmatprep.subr.bf16.mxu0 0
        %721 = vmatpush1.bf16.msra.mxu0 %v651
        %722 = vmatprep.subr.bf16.mxu0 0
        %723 = vmatpush1.bf16.msra.mxu0 %v650
        %724 = vmatprep.subr.bf16.mxu0 0
        %725 = vmatpush1.bf16.msra.mxu0 %v649
        %726 = vmatprep.subr.bf16.mxu0 0
        %727 = vmatpush1.bf16.msra.mxu0 %v648
        %728 = vmatprep.subr.bf16.mxu0 0
        %729 = vmatpush2.bf16.msra.mxu0 %v663
        %730 = vmatprep.subr.bf16.mxu0 0
        %731 = vmatpush2.bf16.msra.mxu0 %v662
        %732 = vmatprep.subr.bf16.mxu0 0
        %733 = vmatpush2.bf16.msra.mxu0 %v661
        %734 = vmatprep.subr.bf16.mxu0 0
        %735 = vmatpush2.bf16.msra.mxu0 %v660
        %736 = vmatprep.subr.bf16.mxu0 0
        %737 = vmatpush2.bf16.msra.mxu0 %v659
        %738 = vmatprep.subr.bf16.mxu0 0
        %739 = vmatpush2.bf16.msra.mxu0 %v658
        %740 = vmatprep.subr.bf16.mxu0 0
        %741 = vmatpush2.bf16.msra.mxu0 %v657
        %742 = vmatprep.subr.bf16.mxu0 0
        %743 = vmatpush2.bf16.msra.mxu0 %v656
        %744 = vmatprep.mubr.bf16.mxu0 %v446
        %745 = vmatmul.mubr.bf16.gmra.mxu0 %v445
        %v746 = vpop.f32.mrf.mxu0
        %v747 = vadd.f32 %v518, %v746
        %v748 = vpop.f32.mrf.mxu0
        %v749 = vpop.f32.mrf.mxu0
        %v750 = vpop.f32.mrf.mxu0
        %751 = vdwg.mxu0
        %752 = vmatprep.subr.bf16.mxu0 0
        %753 = vmatpush1.bf16.msra.mxu0 %v671
        %754 = vmatprep.subr.bf16.mxu0 0
        %755 = vmatpush1.bf16.msra.mxu0 %v670
        %756 = vmatprep.subr.bf16.mxu0 0
        %757 = vmatpush1.bf16.msra.mxu0 %v669
        %758 = vmatprep.subr.bf16.mxu0 0
        %759 = vmatpush1.bf16.msra.mxu0 %v668
        %760 = vmatprep.subr.bf16.mxu0 0
        %761 = vmatpush1.bf16.msra.mxu0 %v667
        %762 = vmatprep.subr.bf16.mxu0 0
        %763 = vmatpush1.bf16.msra.mxu0 %v666
        %764 = vmatprep.subr.bf16.mxu0 0
        %765 = vmatpush1.bf16.msra.mxu0 %v665
        %766 = vmatprep.subr.bf16.mxu0 0
        %767 = vmatpush1.bf16.msra.mxu0 %v664
        %768 = vmatprep.subr.bf16.mxu0 0
        %769 = vmatpush2.bf16.msra.mxu0 %v679
        %770 = vmatprep.subr.bf16.mxu0 0
        %771 = vmatpush2.bf16.msra.mxu0 %v678
        %772 = vmatprep.subr.bf16.mxu0 0
        %773 = vmatpush2.bf16.msra.mxu0 %v677
        %774 = vmatprep.subr.bf16.mxu0 0
        %775 = vmatpush2.bf16.msra.mxu0 %v676
        %776 = vmatprep.subr.bf16.mxu0 0
        %777 = vmatpush2.bf16.msra.mxu0 %v675
        %778 = vmatprep.subr.bf16.mxu0 0
        %779 = vmatpush2.bf16.msra.mxu0 %v674
        %780 = vmatprep.subr.bf16.mxu0 0
        %781 = vmatpush2.bf16.msra.mxu0 %v673
        %782 = vmatprep.subr.bf16.mxu0 0
        %783 = vmatpush2.bf16.msra.mxu0 %v672
        %784 = vmatprep.mubr.bf16.mxu0 %v448
        %785 = vmatmul.mubr.bf16.gmra.mxu0 %v447
        %v786 = vpop.f32.mrf.mxu0
        %v787 = vadd.f32 %v747, %v786
        %v788 = vpop.f32.mrf.mxu0
        %v789 = vpop.f32.mrf.mxu0
        %v790 = vpop.f32.mrf.mxu0
        %791 = vdwg.mxu0
        %792 = vst [vmem:[%s281] sm:$0xff] %v787
        %s793 = sand.u32 %s142, 1
        %s794 = scalar_lea.sflag [#allocation4], %s793
        %s795 = sand.u32 %s142, 1
        %s796 = smul.addr %s795, 8
        %s797 = scalar_lea.vmem [#allocation10], %s796
        // Predicated region
        $region57: #{tpu_custom_call.1} parent=39 // pred_check
          %p798 = pneg %p152
        $region58: #{tpu_custom_call.1} parent=39 // pred_check_branch
          %800 = sbr.rel (%p798) target = $region60
        $region59: #{tpu_custom_call.1} parent=39 // pred_region
          %s802 = ssub.s32 128, 128
          %803 = vsyncadd %s794, %s802
          %s804 = smul.addr %s24, 128
          %s805 = scalar_lea.hbm %s5, %s804
          %s807 = sshll.u32 %s797, 4
          %s808 = int_to_ptr.vmem [resolvable:$true] %s807
          %810 = dma.vmem_to_hbm [thread:$0]  %s808, 128, %s805, %s794
        $region60: #{tpu_custom_call.1} parent=39 // pred_fallthru
          _
      $region40: #{tpu_custom_call.1} parent=5 // pred_fallthru
        _
      %p811 = scmp.le.s32.totalorder 2, %s19
      // Predicated region
      $region61: #{tpu_custom_call.1} parent=5 // pred_check
        %p812 = pneg %p811
      $region62: #{tpu_custom_call.1} parent=5 // pred_check_branch
        %814 = sbr.rel (%p812) target = $region64
      $region63: #{tpu_custom_call.1} parent=5 // pred_region
        %s815 = ssub.s32 %s19, 2
        // Predicated region
        $region65: #{tpu_custom_call.1} parent=63 // pred_check
          %p816 = pneg %p158
        $region66: #{tpu_custom_call.1} parent=63 // pred_check_branch
          %818 = sbr.rel (%p816) target = $region68
        $region67: #{tpu_custom_call.1} parent=63 // pred_region
          %s819 = sand.u32 %s143, 1
          %s820 = scalar_lea.sflag [#allocation4], %s819
          %s821 = sand.u32 %s143, 1
          %s822 = smul.addr %s821, 8
          %s823 = scalar_lea.vmem [#allocation10], %s822
          %824 = dma.done %s820, 128
        $region68: #{tpu_custom_call.1} parent=63 // pred_fallthru
          _
      $region64: #{tpu_custom_call.1} parent=5 // pred_fallthru
        _
    $region6: #{tpu_custom_call.1} parent=1 // loop_footer
      %s23 = sadd.s32 1, %s19
    $region7: #{tpu_custom_call.1} parent=1 // loop_footer_branch
      %18 = sbr.rel target = $region3
    $region8: #{tpu_custom_call.1} parent=1 // loop_exit
      _
    %825 = vsyncpa [#allocation3], 1
    %s826 = scalar_lea.sflag [#allocation3], 1
    %827 = vsyncpa %s826, 1
    %828 = vsyncpa [#allocation6], 1
    %829 = vsyncpa [#allocation9], 1
    %830 = vsyncpa [#allocation4], 1
    %s831 = scalar_lea.sflag [#allocation4], 1
    %832 = vsyncpa %s831, 1

// kernel: tpu_custom_call.1
$region0: #{tpu_custom_call.1}
  #allocation0 [shape = 'u32[]', space=smem, size = 0x4, offset = 0x4, fixed_abs, tag = 'smem constant byte address 0x4 - core index']
  #allocation1 [shape = 'u32[144,128]{1,0:T(1,128)}', space=vmem, size = 0x12000, scoped, tag = 'internal scratch']
  %s0 = inlined_call_operand.hbm [shape: f32[16,32], index: 0, kind: input, shape index: {}]
  %s1 = inlined_call_operand.hbm [shape: bf16[32,512], index: 1, kind: input, shape index: {}]
  %s2 = inlined_call_operand.hbm [shape: f32[1,512], index: 2, kind: input, shape index: {}]
  %s3 = inlined_call_operand.hbm [shape: bf16[512,128], index: 3, kind: input, shape index: {}]
  %s4 = inlined_call_operand.vmem [shape: f32[1,128], index: 4, kind: input, shape index: {}]
  %s5 = inlined_call_operand.hbm [shape: f32[16,128], index: 5, kind: output, shape index: {}]
  %s6 = sld [smem:[#allocation0]]
  $region69: #{tpu_custom_call.1} parent=0
    _
  %s8 = ssub.s32 1, %s6
  %s9 = scalar_select 0, %s8, %s6
  $region1: #{tpu_custom_call.1} parent=0
    #allocation2 [shape = 'u8[8192]{0}', space=vmem, size = 0x2000, scoped, tag = 'input window, operand 0']
    #allocation3 [shape = 's32[2]{0}', space=sflag, size = 0x8, scoped, tag = 'scoped memory for tpu_custom_call.1']
    #allocation4 [shape = 's32[2]{0}', space=sflag, size = 0x8, scoped, tag = 'scoped memory for tpu_custom_call.1']
    #allocation5 [shape = 'u8[32768]{0}', space=vmem, size = 0x8000, scoped, tag = 'input window, operand 1, single buffered']
    #allocation6 [shape = 's32[1]{0}', space=sflag, size = 0x4, scoped, tag = 'scoped memory for tpu_custom_call.1']
    #allocation7 [shape = 'u8[2048]{0}', space=vmem, size = 0x800, scoped, tag = 'input window, operand 2, single buffered']
    #allocation8 [shape = 'u8[131072]{0}', space=vmem, size = 0x20000, scoped, tag = 'input window, operand 3, single buffered']
    #allocation9 [shape = 's32[1]{0}', space=sflag, size = 0x4, scoped, tag = 'scoped memory for tpu_custom_call.1']
    #allocation10 [shape = 'u8[8192]{0}', space=vmem, size = 0x2000, scoped, tag = 'output window, operand 0']
    %10 = vsyncpa [#allocation3], 0
    %s11 = scalar_lea.sflag [#allocation3], 1
    %12 = vsyncpa %s11, 0
    %13 = vsyncpa [#allocation6], 0
    %14 = vsyncpa [#allocation9], 0
    %15 = vsyncpa [#allocation4], 0
    %s16 = scalar_lea.sflag [#allocation4], 1
    %17 = vsyncpa %s16, 0
    loop: start=0, step=1, limit=4
    $region2: #{tpu_custom_call.1} parent=1 // loop_pre_header
      _
    $region3: #{tpu_custom_call.1} parent=1 // loop_header
      %s19 = sphi 0, %s23
      %p20 = scmp.ge.s32.totalorder %s19, 4
      %s29 = sphi 0, %s31
      %s32 = sphi 0, %s29
      %s33 = sphi 0, %s32
      %s49 = sphi 0, %s33
      %s53 = sphi 0, %s53
      %s55 = sphi 0, %s53
      %s56 = sphi 0, %s55
      %s70 = sphi 0, %s56
      %s74 = sphi 0, %s74
      %s76 = sphi 0, %s74
      %s77 = sphi 0, %s76
      %s91 = sphi 0, %s77
      %s95 = sphi 0, %s95
      %s97 = sphi 0, %s95
      %s98 = sphi 0, %s97
      %s112 = sphi 0, %s98
      %s116 = sphi 0, %s116
      %s118 = sphi 0, %s116
      %s119 = sphi 0, %s118
      %s133 = sphi 0, %s119
      %s139 = sphi 0, %s141
      %s142 = sphi 0, %s139
      %s143 = sphi 0, %s142
      %s159 = sphi 0, %s143
    $region4: #{tpu_custom_call.1} parent=1 // loop_header_branch
      %22 = sbr.rel (%p20) target = $region8
    $region5: #{tpu_custom_call.1} parent=1 // loop_body
      %s24 = ssub.s32 %s19, 1
      %s25 = ssub.s32 %s19, 2
      %s26 = sadd.s32 %s19, 1
      %s27 = ssub.s32 %s19, %s26
      %p28 = scmp.eq.s32.totalorder %s27, 0
      %s30 = sadd.s32 %s29, 1
      %s31 = scalar_select %p28, %s29, %s30
      %p34 = pneg %p28
      %p35 = scmp.eq.s32.totalorder %s19, 1
      %p36 = por %p34, %p35
      %p37 = scmp.ne.s32.totalorder %s29, %s32
      %p38 = scmp.eq.s32.totalorder %s19, 0
      %p39 = por %p37, %p38
      %p40 = scmp.ne.s32.totalorder %s29, %s32
      %p41 = scmp.eq.s32.totalorder %s24, 1
      %p42 = por %p40, %p41
      %p43 = scmp.ne.s32.totalorder %s32, %s33
      %p44 = scmp.eq.s32.totalorder %s24, 0
      %p45 = por %p43, %p44
      %p46 = scmp.ne.s32.totalorder %s32, %s33
      %p47 = scmp.eq.s32.totalorder %s25, 1
      %p48 = por %p46, %p47
      %p50 = scmp.ne.s32.totalorder %s33, %s49
      %p51 = scmp.eq.s32.totalorder %s25, 0
      %p52 = por %p50, %p51
      %s54 = sadd.s32 %s53, 1
      %p57 = scmp.eq.s32.totalorder %s19, 1
      %p58 = scmp.ne.s32.totalorder %s53, %s55
      %p59 = scmp.eq.s32.totalorder %s19, 0
      %p60 = por %p58, %p59
      %p61 = scmp.ne.s32.totalorder %s53, %s55
      %p62 = scmp.eq.s32.totalorder %s24, 1
      %p63 = por %p61, %p62
      %p64 = scmp.ne.s32.totalorder %s55, %s56
      %p65 = scmp.eq.s32.totalorder %s24, 0
      %p66 = por %p64, %p65
      %p67 = scmp.ne.s32.totalorder %s55, %s56
      %p68 = scmp.eq.s32.totalorder %s25, 1
      %p69 = por %p67, %p68
      %p71 = scmp.ne.s32.totalorder %s56, %s70
      %p72 = scmp.eq.s32.totalorder %s25, 0
      %p73 = por %p71, %p72
      %s75 = sadd.s32 %s74, 1
      %p78 = scmp.eq.s32.totalorder %s19, 1
      %p79 = scmp.ne.s32.totalorder %s74, %s76
      %p80 = scmp.eq.s32.totalorder %s19, 0
      %p81 = por %p79, %p80
      %p82 = scmp.ne.s32.totalorder %s74, %s76
      %p83 = scmp.eq.s32.totalorder %s24, 1
      %p84 = por %p82, %p83
      %p85 = scmp.ne.s32.totalorder %s76, %s77
      %p86 = scmp.eq.s32.totalorder %s24, 0
      %p87 = por %p85, %p86
      %p88 = scmp.ne.s32.totalorder %s76, %s77
      %p89 = scmp.eq.s32.totalorder %s25, 1
      %p90 = por %p88, %p89
      %p92 = scmp.ne.s32.totalorder %s77, %s91
      %p93 = scmp.eq.s32.totalorder %s25, 0
      %p94 = por %p92, %p93
      %s96 = sadd.s32 %s95, 1
      %p99 = scmp.eq.s32.totalorder %s19, 1
      %p100 = scmp.ne.s32.totalorder %s95, %s97
      %p101 = scmp.eq.s32.totalorder %s19, 0
      %p102 = por %p100, %p101
      %p103 = scmp.ne.s32.totalorder %s95, %s97
      %p104 = scmp.eq.s32.totalorder %s24, 1
      %p105 = por %p103, %p104
      %p106 = scmp.ne.s32.totalorder %s97, %s98
      %p107 = scmp.eq.s32.totalorder %s24, 0
      %p108 = por %p106, %p107
      %p109 = scmp.ne.s32.totalorder %s97, %s98
      %p110 = scmp.eq.s32.totalorder %s25, 1
      %p111 = por %p109, %p110
      %p113 = scmp.ne.s32.totalorder %s98, %s112
      %p114 = scmp.eq.s32.totalorder %s25, 0
      %p115 = por %p113, %p114
      %s117 = sadd.s32 %s116, 1
      %p120 = scmp.eq.s32.totalorder %s19, 1
      %p121 = scmp.ne.s32.totalorder %s116, %s118
      %p122 = scmp.eq.s32.totalorder %s19, 0
      %p123 = por %p121, %p122
      %p124 = scmp.ne.s32.totalorder %s116, %s118
      %p125 = scmp.eq.s32.totalorder %s24, 1
      %p126 = por %p124, %p125
      %p127 = scmp.ne.s32.totalorder %s118, %s119
      %p128 = scmp.eq.s32.totalorder %s24, 0
      %p129 = por %p127, %p128
      %p130 = scmp.ne.s32.totalorder %s118, %s119
      %p131 = scmp.eq.s32.totalorder %s25, 1
      %p132 = por %p130, %p131
      %p134 = scmp.ne.s32.totalorder %s119, %s133
      %p135 = scmp.eq.s32.totalorder %s25, 0
      %p136 = por %p134, %p135
      %s137 = ssub.s32 %s19, %s26
      %p138 = scmp.eq.s32.totalorder %s137, 0
      %s140 = sadd.s32 %s139, 1
      %s141 = scalar_select %p138, %s139, %s140
      %p144 = pneg %p138
      %p145 = scmp.eq.s32.totalorder %s19, 1
      %p146 = por %p144, %p145
      %p147 = scmp.ne.s32.totalorder %s139, %s142
      %p148 = scmp.eq.s32.totalorder %s19, 0
      %p149 = por %p147, %p148
      %p150 = scmp.ne.s32.totalorder %s139, %s142
      %p151 = scmp.eq.s32.totalorder %s24, 1
      %p152 = por %p150, %p151
      %p153 = scmp.ne.s32.totalorder %s142, %s143
      %p154 = scmp.eq.s32.totalorder %s24, 0
      %p155 = por %p153, %p154
      %p156 = scmp.ne.s32.totalorder %s142, %s143
      %p157 = scmp.eq.s32.totalorder %s25, 1
      %p158 = por %p156, %p157
      %p160 = scmp.ne.s32.totalorder %s143, %s159
      %p161 = scmp.eq.s32.totalorder %s25, 0
      %p162 = por %p160, %p161
      %p163 = scmp.le.s32.totalorder 1, %s19
      %p164 = scmp.lt.s32.totalorder %s19, 3
      %p165 = pnand %p163, %p164
      %p166 = pneg %p165
      // Predicated region
      $region9: #{tpu_custom_call.1} parent=5 // pred_check
        _
      $region10: #{tpu_custom_call.1} parent=5 // pred_check_branch
        %168 = sbr.rel (%p165) target = $region12
      $region11: #{tpu_custom_call.1} parent=5 // pred_region
        %s169 = ssub.s32 %s19, 1
        // Predicated region
        $region13: #{tpu_custom_call.1} parent=11 // pred_check
          %p170 = pneg %p66
        $region14: #{tpu_custom_call.1} parent=11 // pred_check_branch
          %172 = sbr.rel (%p170) target = $region16
        $region15: #{tpu_custom_call.1} parent=11 // pred_region
          %s174 = ssub.s32 1024, 1024
          %175 = vsyncadd [#allocation6], %s174
          %s176 = sshll.u32 [#allocation5], 4
          %s177 = int_to_ptr.vmem [resolvable:$true] %s176
          %182 = dma.hbm_to_vmem [thread:$0]  %s1, 1024, %s177, [#allocation6], 256, 256, 16
        $region16: #{tpu_custom_call.1} parent=11 // pred_fallthru
          _
        // Predicated region
        $region17: #{tpu_custom_call.1} parent=11 // pred_check
          %p183 = pneg %p87
        $region18: #{tpu_custom_call.1} parent=11 // pred_check_branch
          %185 = sbr.rel (%p183) target = $region20
        $region19: #{tpu_custom_call.1} parent=11 // pred_region
          %s187 = ssub.s32 64, 64
          %188 = vsyncadd [#allocation6], %s187
          %s190 = sshll.u32 [#allocation7], 4
          %s191 = int_to_ptr.vmem [resolvable:$true] %s190
          %193 = dma.hbm_to_vmem [thread:$0]  %s2, 64, %s191, [#allocation6]
        $region20: #{tpu_custom_call.1} parent=11 // pred_fallthru
          _
        // Predicated region
        $region21: #{tpu_custom_call.1} parent=11 // pred_check
          %p194 = pneg %p108
        $region22: #{tpu_custom_call.1} parent=11 // pred_check_branch
          %196 = sbr.rel (%p194) target = $region24
        $region23: #{tpu_custom_call.1} parent=11 // pred_region
          %s198 = ssub.s32 4096, 4096
          %199 = vsyncadd [#allocation9], %s198
          %s200 = sshll.u32 [#allocation8], 4
          %s201 = int_to_ptr.vmem [resolvable:$true] %s200
          %206 = dma.hbm_to_vmem [thread:$0]  %s3, 4096, %s201, [#allocation9], 64, 64, 4
        $region24: #{tpu_custom_call.1} parent=11 // pred_fallthru
          _
        // Predicated region
        $region25: #{tpu_custom_call.1} parent=11 // pred_check
          %p207 = pneg %p129
        $region26: #{tpu_custom_call.1} parent=11 // pred_check_branch
          %209 = sbr.rel (%p207) target = $region28
        $region27: #{tpu_custom_call.1} parent=11 // pred_region
          _
        $region28: #{tpu_custom_call.1} parent=11 // pred_fallthru
          _
      $region12: #{tpu_custom_call.1} parent=5 // pred_fallthru
        _
      %p210 = scmp.lt.s32.totalorder %s19, 2
      // Predicated region
      $region29: #{tpu_custom_call.1} parent=5 // pred_check
        %p211 = pneg %p210
      $region30: #{tpu_custom_call.1} parent=5 // pred_check_branch
        %213 = sbr.rel (%p211) target = $region32
      $region31: #{tpu_custom_call.1} parent=5 // pred_region
        // Predicated region
        $region33: #{tpu_custom_call.1} parent=31 // pred_check
          %p214 = pneg %p39
        $region34: #{tpu_custom_call.1} parent=31 // pred_check_branch
          %216 = sbr.rel (%p214) target = $region36
        $region35: #{tpu_custom_call.1} parent=31 // pred_region
          %s217 = sand.u32 %s29, 1
          %s218 = scalar_lea.sflag [#allocation3], %s217
          %s219 = sand.u32 %s29, 1
          %s220 = smul.addr %s219, 8
          %s221 = scalar_lea.vmem [#allocation2], %s220
          %s223 = ssub.s32 128, 128
          %224 = vsyncadd %s218, %s223
          %s225 = smul.addr %s19, 128
          %s226 = scalar_lea.hbm %s0, %s225
          %s228 = sshll.u32 %s221, 4
          %s229 = int_to_ptr.vmem [resolvable:$true] %s228
          %231 = dma.hbm_to_vmem [thread:$0]  %s226, 128, %s229, %s218
        $region36: #{tpu_custom_call.1} parent=31 // pred_fallthru
          _
      $region32: #{tpu_custom_call.1} parent=5 // pred_fallthru
        _
      %p232 = scmp.le.s32.totalorder 1, %s19
      %p233 = scmp.lt.s32.totalorder %s19, 3
      %p234 = pnand %p232, %p233
      %p235 = pneg %p234
      // Predicated region
      $region37: #{tpu_custom_call.1} parent=5 // pred_check
        _
      $region38: #{tpu_custom_call.1} parent=5 // pred_check_branch
        %237 = sbr.rel (%p234) target = $region40
      $region39: #{tpu_custom_call.1} parent=5 // pred_region
        %s238 = ssub.s32 %s19, 1
        %s239 = sand.u32 %s32, 1
        %s240 = scalar_lea.sflag [#allocation3], %s239
        %s241 = sand.u32 %s32, 1
        %s242 = smul.addr %s241, 8
        %s243 = scalar_lea.vmem [#allocation2], %s242
        // Predicated region
        $region41: #{tpu_custom_call.1} parent=39 // pred_check
          %p244 = pneg %p45
        $region42: #{tpu_custom_call.1} parent=39 // pred_check_branch
          %246 = sbr.rel (%p244) target = $region44
        $region43: #{tpu_custom_call.1} parent=39 // pred_region
          %247 = dma.done %s240, 128
        $region44: #{tpu_custom_call.1} parent=39 // pred_fallthru
          _
        // Predicated region
        $region45: #{tpu_custom_call.1} parent=39 // pred_check
          %p248 = pneg %p66
        $region46: #{tpu_custom_call.1} parent=39 // pred_check_branch
          %250 = sbr.rel (%p248) target = $region48
        $region47: #{tpu_custom_call.1} parent=39 // pred_region
          %251 = dma.done [#allocation6], 1024
        $region48: #{tpu_custom_call.1} parent=39 // pred_fallthru
          _
        // Predicated region
        $region49: #{tpu_custom_call.1} parent=39 // pred_check
          %p252 = pneg %p87
        $region50: #{tpu_custom_call.1} parent=39 // pred_check_branch
          %254 = sbr.rel (%p252) target = $region52
        $region51: #{tpu_custom_call.1} parent=39 // pred_region
          %255 = dma.done [#allocation6], 64
        $region52: #{tpu_custom_call.1} parent=39 // pred_fallthru
          _
        // Predicated region
        $region53: #{tpu_custom_call.1} parent=39 // pred_check
          %p256 = pneg %p108
        $region54: #{tpu_custom_call.1} parent=39 // pred_check_branch
          %258 = sbr.rel (%p256) target = $region56
        $region55: #{tpu_custom_call.1} parent=39 // pred_region
          %259 = dma.done [#allocation9], 4096
        $region56: #{tpu_custom_call.1} parent=39 // pred_fallthru
          _
        %s260 = sand.u32 %s32, 1
        %s261 = scalar_lea.sflag [#allocation3], %s260
        %s262 = sand.u32 %s32, 1
        %s263 = smul.addr %s262, 8
        %s264 = scalar_lea.vmem [#allocation2], %s263
        %p265 = pneg %p45
        %p266 = pneg %p42
        %p267 = pneg %p66
        %p268 = pneg %p63
        %p269 = pneg %p87
        %p270 = pneg %p84
        %p271 = pneg %p108
        %p272 = pneg %p105
        %p273 = pneg %p129
        %p274 = pneg %p126
        %p275 = pneg %p155
        %p276 = pneg %p152
        %s277 = sand.u32 %s142, 1
        %s278 = scalar_lea.sflag [#allocation4], %s277
        %s279 = sand.u32 %s142, 1
        %s280 = smul.addr %s279, 8
        %s281 = scalar_lea.vmem [#allocation10], %s280
        %v283 = vld [vmem:[%s243] sm:$0xff]
        %v284 = vpack.c.bf16 %v283, %v283
        %v285 = vld [vmem:[#allocation5] sm:$0xff]
        %v286 = vld [vmem:[#allocation5 + $0x8] sm:$0xff]
        %v287 = vld [vmem:[#allocation5 + $0x10] sm:$0xff]
        %v288 = vld [vmem:[#allocation5 + $0x18] sm:$0xff]
        %v289 = vld [vmem:[#allocation5 + $0x20] sm:$0xff]
        %v290 = vld [vmem:[#allocation5 + $0x28] sm:$0xff]
        %v291 = vld [vmem:[#allocation5 + $0x30] sm:$0xff]
        %v292 = vld [vmem:[#allocation5 + $0x38] sm:$0xff]
        %v293 = vld [vmem:[#allocation7] sm:$0xf]
        %v295 = vlaneseq
        %v296 = vshrl.u32 %v295, 7
        %v297 = vsub.s32 0, %v296
        %v298 = vrot.slane %v293, %v297
        %v299 = vlaneseq
        %v300 = vshrl.u32 %v299, 7
        %v301 = vsub.s32 1, %v300
        %v302 = vrot.slane %v293, %v301
        %v303 = vlaneseq
        %v304 = vshrl.u32 %v303, 7
        %v305 = vsub.s32 2, %v304
        %v306 = vrot.slane %v293, %v305
        %v307 = vlaneseq
        %v308 = vshrl.u32 %v307, 7
        %v309 = vsub.s32 3, %v308
        %v310 = vrot.slane %v293, %v309
        %v323 = vunpack.c.l.b16 %v285
        %v324 = vunpack.c.h.b16 %v285
        %v325 = vunpack.c.l.b16 %v286
        %v326 = vunpack.c.h.b16 %v286
        %v327 = vunpack.c.l.b16 %v287
        %v328 = vunpack.c.h.b16 %v287
        %v329 = vunpack.c.l.b16 %v288
        %v330 = vunpack.c.h.b16 %v288
        %v331 = vunpack.c.l.b16 %v289
        %v332 = vunpack.c.h.b16 %v289
        %v333 = vunpack.c.l.b16 %v290
        %v334 = vunpack.c.h.b16 %v290
        %v335 = vunpack.c.l.b16 %v291
        %v336 = vunpack.c.h.b16 %v291
        %v337 = vunpack.c.l.b16 %v292
        %v338 = vunpack.c.h.b16 %v292
        %v339 = vpack.c.b16 %v327, %v323
        %v340 = vpack.c.b16 %v328, %v324
        %v341 = vpack.c.b16 %v329, %v325
        %v342 = vpack.c.b16 %v330, %v326
        %v343 = vpack.c.b16 %v335, %v331
        %v344 = vpack.c.b16 %v336, %v332
        %v345 = vpack.c.b16 %v337, %v333
        %v346 = vpack.c.b16 %v338, %v334
        %vm355 = vcmask 261120
        %v357 = vsel %vm355, %v284, 0
        %359 = vmatprep.subr.bf16.mxu0 0
        %360 = vmatpush1.bf16.msra.mxu0 0
        %361 = vmatprep.subr.bf16.mxu0 0
        %362 = vmatpush1.bf16.msra.mxu0 0
        %363 = vmatprep.subr.bf16.mxu0 0
        %364 = vmatpush1.bf16.msra.mxu0 0
        %365 = vmatprep.subr.bf16.mxu0 0
        %366 = vmatpush1.bf16.msra.mxu0 0
        %367 = vmatprep.subr.bf16.mxu0 0
        %368 = vmatpush1.bf16.msra.mxu0 0
        %369 = vmatprep.subr.bf16.mxu0 0
        %370 = vmatpush1.bf16.msra.mxu0 0
        %371 = vmatprep.subr.bf16.mxu0 %v344
        %372 = vmatpush1.bf16.msra.mxu0 %v343
        %373 = vmatprep.subr.bf16.mxu0 %v340
        %374 = vmatpush1.bf16.msra.mxu0 %v339
        %375 = vmatprep.subr.bf16.mxu0 0
        %376 = vmatpush2.bf16.msra.mxu0 0
        %377 = vmatprep.subr.bf16.mxu0 0
        %378 = vmatpush2.bf16.msra.mxu0 0
        %379 = vmatprep.subr.bf16.mxu0 0
        %380 = vmatpush2.bf16.msra.mxu0 0
        %381 = vmatprep.subr.bf16.mxu0 0
        %382 = vmatpush2.bf16.msra.mxu0 0
        %383 = vmatprep.subr.bf16.mxu0 0
        %384 = vmatpush2.bf16.msra.mxu0 0
        %385 = vmatprep.subr.bf16.mxu0 0
        %386 = vmatpush2.bf16.msra.mxu0 0
        %387 = vmatprep.subr.bf16.mxu0 0
        %388 = vmatpush2.bf16.msra.mxu0 0
        %389 = vmatprep.subr.bf16.mxu0 0
        %390 = vmatpush2.bf16.msra.mxu0 0
        %391 = vmatprep.mubr.bf16.mxu0 0
        %392 = vmatmul.mubr.bf16.gmra.mxu0 %v357
        %v393 = vpop.f32.mrf.mxu0
        %v394 = vadd.f32 %v298, %v393
        %v395 = vpop.f32.mrf.mxu0
        %v396 = vadd.f32 %v302, %v395
        %v397 = vpop.f32.mrf.mxu0
        %v398 = vpop.f32.mrf.mxu0
        %399 = vdwg.mxu0
        %400 = vmatprep.subr.bf16.mxu0 0
        %401 = vmatpush1.bf16.msra.mxu0 0
        %402 = vmatprep.subr.bf16.mxu0 0
        %403 = vmatpush1.bf16.msra.mxu0 0
        %404 = vmatprep.subr.bf16.mxu0 0
        %405 = vmatpush1.bf16.msra.mxu0 0
        %406 = vmatprep.subr.bf16.mxu0 0
        %407 = vmatpush1.bf16.msra.mxu0 0
        %408 = vmatprep.subr.bf16.mxu0 0
        %409 = vmatpush1.bf16.msra.mxu0 0
        %410 = vmatprep.subr.bf16.mxu0 0
        %411 = vmatpush1.bf16.msra.mxu0 0
        %412 = vmatprep.subr.bf16.mxu0 %v346
        %413 = vmatpush1.bf16.msra.mxu0 %v345
        %414 = vmatprep.subr.bf16.mxu0 %v342
        %415 = vmatpush1.bf16.msra.mxu0 %v341
        %416 = vmatprep.subr.bf16.mxu0 0
        %417 = vmatpush2.bf16.msra.mxu0 0
        %418 = vmatprep.subr.bf16.mxu0 0
        %419 = vmatpush2.bf16.msra.mxu0 0
        %420 = vmatprep.subr.bf16.mxu0 0
        %421 = vmatpush2.bf16.msra.mxu0 0
        %422 = vmatprep.subr.bf16.mxu0 0
        %423 = vmatpush2.bf16.msra.mxu0 0
        %424 = vmatprep.subr.bf16.mxu0 0
        %425 = vmatpush2.bf16.msra.mxu0 0
        %426 = vmatprep.subr.bf16.mxu0 0
        %427 = vmatpush2.bf16.msra.mxu0 0
        %428 = vmatprep.subr.bf16.mxu0 0
        %429 = vmatpush2.bf16.msra.mxu0 0
        %430 = vmatprep.subr.bf16.mxu0 0
        %431 = vmatpush2.bf16.msra.mxu0 0
        %432 = vmatprep.mubr.bf16.mxu0 0
        %433 = vmatmul.mubr.bf16.gmra.mxu0 %v357
        %v434 = vpop.f32.mrf.mxu0
        %v435 = vadd.f32 %v306, %v434
        %v436 = vpop.f32.mrf.mxu0
        %v437 = vadd.f32 %v310, %v436
        %v438 = vpop.f32.mrf.mxu0
        %v439 = vpop.f32.mrf.mxu0
        %440 = vdwg.mxu0
        %v441 = vmax.f32 %v394, 0.0
        %v442 = vmax.f32 %v396, 0.0
        %v443 = vmax.f32 %v435, 0.0
        %v444 = vmax.f32 %v437, 0.0
        %v445 = vpack.c.bf16 %v441, %v441
        %v446 = vpack.c.bf16 %v442, %v442
        %v447 = vpack.c.bf16 %v443, %v443
        %v448 = vpack.c.bf16 %v444, %v444
        %v449 = vld [vmem:[#allocation8] sm:$0xf]
        %v450 = vld [vmem:[#allocation8 + $0x4] sm:$0xf]
        %v451 = vld [vmem:[#allocation8 + $0x8] sm:$0xf]
        %v452 = vld [vmem:[#allocation8 + $0xc] sm:$0xf]
        %v453 = vld [vmem:[#allocation8 + $0x10] sm:$0xf]
        %v454 = vld [vmem:[#allocation8 + $0x14] sm:$0xf]
        %v455 = vld [vmem:[#allocation8 + $0x18] sm:$0xf]
        %v456 = vld [vmem:[#allocation8 + $0x1c] sm:$0xf]
        %v457 = vld [vmem:[#allocation8 + $0x20] sm:$0xf]
        %v458 = vld [vmem:[#allocation8 + $0x24] sm:$0xf]
        %v459 = vld [vmem:[#allocation8 + $0x28] sm:$0xf]
        %v460 = vld [vmem:[#allocation8 + $0x2c] sm:$0xf]
        %v461 = vld [vmem:[#allocation8 + $0x30] sm:$0xf]
        %v462 = vld [vmem:[#allocation8 + $0x34] sm:$0xf]
        %v463 = vld [vmem:[#allocation8 + $0x38] sm:$0xf]
        %v464 = vld [vmem:[#allocation8 + $0x3c] sm:$0xf]
        %v465 = vld [vmem:[#allocation8 + $0x40] sm:$0xf]
        %v466 = vld [vmem:[#allocation8 + $0x44] sm:$0xf]
        %v467 = vld [vmem:[#allocation8 + $0x48] sm:$0xf]
        %v468 = vld [vmem:[#allocation8 + $0x4c] sm:$0xf]
        %v469 = vld [vmem:[#allocation8 + $0x50] sm:$0xf]
        %v470 = vld [vmem:[#allocation8 + $0x54] sm:$0xf]
        %v471 = vld [vmem:[#allocation8 + $0x58] sm:$0xf]
        %v472 = vld [vmem:[#allocation8 + $0x5c] sm:$0xf]
        %v473 = vld [vmem:[#allocation8 + $0x60] sm:$0xf]
        %v474 = vld [vmem:[#allocation8 + $0x64] sm:$0xf]
        %v475 = vld [vmem:[#allocation8 + $0x68] sm:$0xf]
        %v476 = vld [vmem:[#allocation8 + $0x6c] sm:$0xf]
        %v477 = vld [vmem:[#allocation8 + $0x70] sm:$0xf]
        %v478 = vld [vmem:[#allocation8 + $0x74] sm:$0xf]
        %v479 = vld [vmem:[#allocation8 + $0x78] sm:$0xf]
        %v480 = vld [vmem:[#allocation8 + $0x7c] sm:$0xf]
        %v481 = vld [vmem:[#allocation8 + $0x80] sm:$0xf]
        %v482 = vld [vmem:[#allocation8 + $0x84] sm:$0xf]
        %v483 = vld [vmem:[#allocation8 + $0x88] sm:$0xf]
        %v484 = vld [vmem:[#allocation8 + $0x8c] sm:$0xf]
        %v485 = vld [vmem:[#allocation8 + $0x90] sm:$0xf]
        %v486 = vld [vmem:[#allocation8 + $0x94] sm:$0xf]
        %v487 = vld [vmem:[#allocation8 + $0x98] sm:$0xf]
        %v488 = vld [vmem:[#allocation8 + $0x9c] sm:$0xf]
        %v489 = vld [vmem:[#allocation8 + $0xa0] sm:$0xf]
        %v490 = vld [vmem:[#allocation8 + $0xa4] sm:$0xf]
        %v491 = vld [vmem:[#allocation8 + $0xa8] sm:$0xf]
        %v492 = vld [vmem:[#allocation8 + $0xac] sm:$0xf]
        %v493 = vld [vmem:[#allocation8 + $0xb0] sm:$0xf]
        %v494 = vld [vmem:[#allocation8 + $0xb4] sm:$0xf]
        %v495 = vld [vmem:[#allocation8 + $0xb8] sm:$0xf]
        %v496 = vld [vmem:[#allocation8 + $0xbc] sm:$0xf]
        %v497 = vld [vmem:[#allocation8 + $0xc0] sm:$0xf]
        %v498 = vld [vmem:[#allocation8 + $0xc4] sm:$0xf]
        %v499 = vld [vmem:[#allocation8 + $0xc8] sm:$0xf]
        %v500 = vld [vmem:[#allocation8 + $0xcc] sm:$0xf]
        %v501 = vld [vmem:[#allocation8 + $0xd0] sm:$0xf]
        %v502 = vld [vmem:[#allocation8 + $0xd4] sm:$0xf]
        %v503 = vld [vmem:[#allocation8 + $0xd8] sm:$0xf]
        %v504 = vld [vmem:[#allocation8 + $0xdc] sm:$0xf]
        %v505 = vld [vmem:[#allocation8 + $0xe0] sm:$0xf]
        %v506 = vld [vmem:[#allocation8 + $0xe4] sm:$0xf]
        %v507 = vld [vmem:[#allocation8 + $0xe8] sm:$0xf]
        %v508 = vld [vmem:[#allocation8 + $0xec] sm:$0xf]
        %v509 = vld [vmem:[#allocation8 + $0xf0] sm:$0xf]
        %v510 = vld [vmem:[#allocation8 + $0xf4] sm:$0xf]
        %v511 = vld [vmem:[#allocation8 + $0xf8] sm:$0xf]
        %v512 = vld [vmem:[#allocation8 + $0xfc] sm:$0xf]
        %v513 = vld [vmem:[%s4] sm:$0x1]
        %v515 = vlaneseq
        %v516 = vshrl.u32 %v515, 7
        %v517 = vsub.s32 0, %v516
        %v518 = vrot.slane %v513, %v517
        %v584 = vunpack.c.l.b16 %v449
        %v585 = vunpack.c.l.b16 %v450
        %v586 = vunpack.c.l.b16 %v451
        %v587 = vunpack.c.l.b16 %v452
        %v588 = vunpack.c.l.b16 %v453
        %v589 = vunpack.c.l.b16 %v454
        %v590 = vunpack.c.l.b16 %v455
        %v591 = vunpack.c.l.b16 %v456
        %v592 = vunpack.c.l.b16 %v457
        %v593 = vunpack.c.l.b16 %v458
        %v594 = vunpack.c.l.b16 %v459
        %v595 = vunpack.c.l.b16 %v460
        %v596 = vunpack.c.l.b16 %v461
        %v597 = vunpack.c.l.b16 %v462
        %v598 = vunpack.c.l.b16 %v463
        %v599 = vunpack.c.l.b16 %v464
        %v600 = vunpack.c.l.b16 %v465
        %v601 = vunpack.c.l.b16 %v466
        %v602 = vunpack.c.l.b16 %v467
        %v603 = vunpack.c.l.b16 %v468
        %v604 = vunpack.c.l.b16 %v469
        %v605 = vunpack.c.l.b16 %v470
        %v606 = vunpack.c.l.b16 %v471
        %v607 = vunpack.c.l.b16 %v472
        %v608 = vunpack.c.l.b16 %v473
        %v609 = vunpack.c.l.b16 %v474
        %v610 = vunpack.c.l.b16 %v475
        %v611 = vunpack.c.l.b16 %v476
        %v612 = vunpack.c.l.b16 %v477
        %v613 = vunpack.c.l.b16 %v478
        %v614 = vunpack.c.l.b16 %v479
        %v615 = vunpack.c.l.b16 %v480
        %v616 = vunpack.c.l.b16 %v481
        %v617 = vunpack.c.l.b16 %v482
        %v618 = vunpack.c.l.b16 %v483
        %v619 = vunpack.c.l.b16 %v484
        %v620 = vunpack.c.l.b16 %v485
        %v621 = vunpack.c.l.b16 %v486
        %v622 = vunpack.c.l.b16 %v487
        %v623 = vunpack.c.l.b16 %v488
        %v624 = vunpack.c.l.b16 %v489
        %v625 = vunpack.c.l.b16 %v490
        %v626 = vunpack.c.l.b16 %v491
        %v627 = vunpack.c.l.b16 %v492
        %v628 = vunpack.c.l.b16 %v493
        %v629 = vunpack.c.l.b16 %v494
        %v630 = vunpack.c.l.b16 %v495
        %v631 = vunpack.c.l.b16 %v496
        %v632 = vunpack.c.l.b16 %v497
        %v633 = vunpack.c.l.b16 %v498
        %v634 = vunpack.c.l.b16 %v499
        %v635 = vunpack.c.l.b16 %v500
        %v636 = vunpack.c.l.b16 %v501
        %v637 = vunpack.c.l.b16 %v502
        %v638 = vunpack.c.l.b16 %v503
        %v639 = vunpack.c.l.b16 %v504
        %v640 = vunpack.c.l.b16 %v505
        %v641 = vunpack.c.l.b16 %v506
        %v642 = vunpack.c.l.b16 %v507
        %v643 = vunpack.c.l.b16 %v508
        %v644 = vunpack.c.l.b16 %v509
        %v645 = vunpack.c.l.b16 %v510
        %v646 = vunpack.c.l.b16 %v511
        %v647 = vunpack.c.l.b16 %v512
        %v648 = vpack.c.b16 %v585, %v584
        %v649 = vpack.c.b16 %v587, %v586
        %v650 = vpack.c.b16 %v589, %v588
        %v651 = vpack.c.b16 %v591, %v590
        %v652 = vpack.c.b16 %v593, %v592
        %v653 = vpack.c.b16 %v595, %v594
        %v654 = vpack.c.b16 %v597, %v596
        %v655 = vpack.c.b16 %v599, %v598
        %v656 = vpack.c.b16 %v601, %v600
        %v657 = vpack.c.b16 %v603, %v602
        %v658 = vpack.c.b16 %v605, %v604
        %v659 = vpack.c.b16 %v607, %v606
        %v660 = vpack.c.b16 %v609, %v608
        %v661 = vpack.c.b16 %v611, %v610
        %v662 = vpack.c.b16 %v613, %v612
        %v663 = vpack.c.b16 %v615, %v614
        %v664 = vpack.c.b16 %v617, %v616
        %v665 = vpack.c.b16 %v619, %v618
        %v666 = vpack.c.b16 %v621, %v620
        %v667 = vpack.c.b16 %v623, %v622
        %v668 = vpack.c.b16 %v625, %v624
        %v669 = vpack.c.b16 %v627, %v626
        %v670 = vpack.c.b16 %v629, %v628
        %v671 = vpack.c.b16 %v631, %v630
        %v672 = vpack.c.b16 %v633, %v632
        %v673 = vpack.c.b16 %v635, %v634
        %v674 = vpack.c.b16 %v637, %v636
        %v675 = vpack.c.b16 %v639, %v638
        %v676 = vpack.c.b16 %v641, %v640
        %v677 = vpack.c.b16 %v643, %v642
        %v678 = vpack.c.b16 %v645, %v644
        %v679 = vpack.c.b16 %v647, %v646
        %712 = vmatprep.subr.bf16.mxu0 0
        %713 = vmatpush1.bf16.msra.mxu0 %v655
        %714 = vmatprep.subr.bf16.mxu0 0
        %715 = vmatpush1.bf16.msra.mxu0 %v654
        %716 = vmatprep.subr.bf16.mxu0 0
        %717 = vmatpush1.bf16.msra.mxu0 %v653
        %718 = vmatprep.subr.bf16.mxu0 0
        %719 = vmatpush1.bf16.msra.mxu0 %v652
        %720 = vmatprep.subr.bf16.mxu0 0
        %721 = vmatpush1.bf16.msra.mxu0 %v651
        %722 = vmatprep.subr.bf16.mxu0 0
        %723 = vmatpush1.bf16.msra.mxu0 %v650
        %724 = vmatprep.subr.bf16.mxu0 0
        %725 = vmatpush1.bf16.msra.mxu0 %v649
        %726 = vmatprep.subr.bf16.mxu0 0
        %727 = vmatpush1.bf16.msra.mxu0 %v648
        %728 = vmatprep.subr.bf16.mxu0 0
        %729 = vmatpush2.bf16.msra.mxu0 %v663
        %730 = vmatprep.subr.bf16.mxu0 0
        %731 = vmatpush2.bf16.msra.mxu0 %v662
        %732 = vmatprep.subr.bf16.mxu0 0
        %733 = vmatpush2.bf16.msra.mxu0 %v661
        %734 = vmatprep.subr.bf16.mxu0 0
        %735 = vmatpush2.bf16.msra.mxu0 %v660
        %736 = vmatprep.subr.bf16.mxu0 0
        %737 = vmatpush2.bf16.msra.mxu0 %v659
        %738 = vmatprep.subr.bf16.mxu0 0
        %739 = vmatpush2.bf16.msra.mxu0 %v658
        %740 = vmatprep.subr.bf16.mxu0 0
        %741 = vmatpush2.bf16.msra.mxu0 %v657
        %742 = vmatprep.subr.bf16.mxu0 0
        %743 = vmatpush2.bf16.msra.mxu0 %v656
        %744 = vmatprep.mubr.bf16.mxu0 %v446
        %745 = vmatmul.mubr.bf16.gmra.mxu0 %v445
        %v746 = vpop.f32.mrf.mxu0
        %v747 = vadd.f32 %v518, %v746
        %v748 = vpop.f32.mrf.mxu0
        %v749 = vpop.f32.mrf.mxu0
        %v750 = vpop.f32.mrf.mxu0
        %751 = vdwg.mxu0
        %752 = vmatprep.subr.bf16.mxu0 0
        %753 = vmatpush1.bf16.msra.mxu0 %v671
        %754 = vmatprep.subr.bf16.mxu0 0
        %755 = vmatpush1.bf16.msra.mxu0 %v670
        %756 = vmatprep.subr.bf16.mxu0 0
        %757 = vmatpush1.bf16.msra.mxu0 %v669
        %758 = vmatprep.subr.bf16.mxu0 0
        %759 = vmatpush1.bf16.msra.mxu0 %v668
        %760 = vmatprep.subr.bf16.mxu0 0
        %761 = vmatpush1.bf16.msra.mxu0 %v667
        %762 = vmatprep.subr.bf16.mxu0 0
        %763 = vmatpush1.bf16.msra.mxu0 %v666
        %764 = vmatprep.subr.bf16.mxu0 0
        %765 = vmatpush1.bf16.msra.mxu0 %v665
        %766 = vmatprep.subr.bf16.mxu0 0
        %767 = vmatpush1.bf16.msra.mxu0 %v664
        %768 = vmatprep.subr.bf16.mxu0 0
        %769 = vmatpush2.bf16.msra.mxu0 %v679
        %770 = vmatprep.subr.bf16.mxu0 0
        %771 = vmatpush2.bf16.msra.mxu0 %v678
        %772 = vmatprep.subr.bf16.mxu0 0
        %773 = vmatpush2.bf16.msra.mxu0 %v677
        %774 = vmatprep.subr.bf16.mxu0 0
        %775 = vmatpush2.bf16.msra.mxu0 %v676
        %776 = vmatprep.subr.bf16.mxu0 0
        %777 = vmatpush2.bf16.msra.mxu0 %v675
        %778 = vmatprep.subr.bf16.mxu0 0
        %779 = vmatpush2.bf16.msra.mxu0 %v674
        %780 = vmatprep.subr.bf16.mxu0 0
        %781 = vmatpush2.bf16.msra.mxu0 %v673
        %782 = vmatprep.subr.bf16.mxu0 0
        %783 = vmatpush2.bf16.msra.mxu0 %v672
        %784 = vmatprep.mubr.bf16.mxu0 %v448
        %785 = vmatmul.mubr.bf16.gmra.mxu0 %v447
        %v786 = vpop.f32.mrf.mxu0
        %v787 = vadd.f32 %v747, %v786
        %v788 = vpop.f32.mrf.mxu0
        %v789 = vpop.f32.mrf.mxu0
        %v790 = vpop.f32.mrf.mxu0
        %791 = vdwg.mxu0
        %792 = vst [vmem:[%s281] sm:$0xff] %v787
        %s793 = sand.u32 %s142, 1
        %s794 = scalar_lea.sflag [#allocation4], %s793
        %s795 = sand.u32 %s142, 1
        %s796 = smul.addr %s795, 8
        %s797 = scalar_lea.vmem [#allocation10], %s796
        // Predicated region
        $region57: #{tpu_custom_call.1} parent=39 // pred_check
          %p798 = pneg %p152
        $region58: #{tpu_custom_call.1} parent=39 // pred_check_branch
          %800 = sbr.rel (%p798) target = $region60
        $region59: #{tpu_custom_call.1} parent=39 // pred_region
          %s802 = ssub.s32 128, 128
          %803 = vsyncadd %s794, %s802
          %s804 = smul.addr %s24, 128
          %s805 = scalar_lea.hbm %s5, %s804
          %s807 = sshll.u32 %s797, 4
          %s808 = int_to_ptr.vmem [resolvable:$true] %s807
          %810 = dma.vmem_to_hbm [thread:$0]  %s808, 128, %s805, %s794
        $region60: #{tpu_custom_call.1} parent=39 // pred_fallthru
          _
      $region40: #{tpu_custom_call.1} parent=5 // pred_fallthru
        _
      %p811 = scmp.le.s32.totalorder 2, %s19
      // Predicated region
      $region61: #{tpu_custom_call.1} parent=5 // pred_check
        %p812 = pneg %p811
      $region62: #{tpu_custom_call.1} parent=5 // pred_check_branch
        %814 = sbr.rel (%p812) target = $region64
      $region63: #{tpu_custom_call.1} parent=5 // pred_region
        %s815 = ssub.s32 %s19, 2
        // Predicated region
        $region65: #{tpu_custom_call.1} parent=63 // pred_check
          %p816 = pneg %p158
        $region66: #{tpu_custom_call.1} parent=63 // pred_check_branch
          %818 = sbr.rel (%p816) target = $region68
        $region67: #{tpu_custom_call.1} parent=63 // pred_region
          %s819 = sand.u32 %s143, 1
          %s820 = scalar_lea.sflag [#allocation4], %s819
          %s821 = sand.u32 %s143, 1
          %s822 = smul.addr %s821, 8
          %s823 = scalar_lea.vmem [#allocation10], %s822
          %824 = dma.done %s820, 128
        $region68: #{tpu_custom_call.1} parent=63 // pred_fallthru
          _
      $region64: #{tpu_custom_call.1} parent=5 // pred_fallthru
        _
    $region6: #{tpu_custom_call.1} parent=1 // loop_footer
      %s23 = sadd.s32 1, %s19
    $region7: #{tpu_custom_call.1} parent=1 // loop_footer_branch
      %18 = sbr.rel target = $region3
    $region8: #{tpu_custom_call.1} parent=1 // loop_exit
      _
    %825 = vsyncpa [#allocation3], 1
    %s826 = scalar_lea.sflag [#allocation3], 1
    %827 = vsyncpa %s826, 1
    %828 = vsyncpa [#allocation6], 1
    %829 = vsyncpa [#allocation9], 1
    %830 = vsyncpa [#allocation4], 1
    %s831 = scalar_lea.sflag [#allocation4], 1
    %832 = vsyncpa %s831, 1

</llo_original>
